<compile_context>
chip_gen: v7x
topology: tpu7x:2x2x1
jax: 0.10.0
libtpu: 0.0.40
codegen_flags: <defaults>
</compile_context>

<pallas_src>
import math

import jax
import jax.numpy as jnp
from jax.experimental import pallas as pl
from jax.experimental.pallas import tpu as pltpu

LANE = 128


# ---------------------------------------------------------------------------
# In-kernel math helpers (traced into the Pallas kernel body)
# ---------------------------------------------------------------------------
def _erf(z):
    # Abramowitz & Stegun 7.1.26 rational approximation; the 1/(1+p|z|) term
    # uses the EUP reciprocal estimate (free slot).
    a1, a2, a3, a4, a5 = (0.254829592, -0.284496736, 1.421413741,
                          -1.453152027, 1.061405429)
    p = 0.3275911
    sgn = jnp.where(z >= 0.0, 1.0, -1.0)
    az = jnp.abs(z)
    t = pl.reciprocal(1.0 + p * az, approx=True)
    poly = t * (a1 + t * (a2 + t * (a3 + t * (a4 + t * a5))))
    return sgn * (1.0 - poly * jnp.exp(-az * az))


def _gelu_exact(v):
    # nn.GELU() default = exact (erf-based) GELU.
    # TODO(synk): switch to tanh-GELU only if a bundle dump shows VALU binding here.
    return 0.5 * v * (1.0 + _erf(v * (1.0 / math.sqrt(2.0))))


# ---------------------------------------------------------------------------
# Pallas kernel: one grid step == one batch element, fully fused block
# ---------------------------------------------------------------------------
def _make_kernel(n_heads, head_dim, seq_q, seq_k, channels, channels_pad,
                 hidden_pad, add_residual, lk_chunk, hid_chunk):
    H, Dh, Lq, Lk = n_heads, head_dim, seq_q, seq_k
    C, Cp, Cmp = channels, channels_pad, hidden_pad
    inv_c = 1.0 / C                         # LN stats over the *valid* lanes only
    n_kc = -(-Lk // lk_chunk)               # static chunk counts (1 at test shapes)
    n_hc = -(-Cmp // hid_chunk)

    def kernel(x_ref, y_ref, ln_ref, wqT_ref, wkvT_ref, woT_ref,
               w1T_ref, b1_ref, w2T_ref, b2_ref, out_ref, attn_ref):
        f32, bf16 = jnp.float32, jnp.bfloat16
        Coutp = out_ref.shape[-1]

        x = x_ref[0].astype(f32)            # (Lq, Cp); padded lanes are zero
        y = y_ref[0].astype(f32)            # (Lk, Cp)

        # LayerNorm affine params packed as rows of a (6, Cp) array (zero-padded).
        g11, b11 = ln_ref[0:1, :], ln_ref[1:2, :]   # pre-scaled by 1/sqrt(Dh)
        g12, b12 = ln_ref[2:3, :], ln_ref[3:4, :]
        g2, b2l = ln_ref[4:5, :], ln_ref[5:6, :]

        def layer_norm(t, g, b):
            # One-pass E[x^2]-mu^2 form: zero-padded lanes contribute nothing and
            # the zero-padded affine params keep them exactly zero on output.
            mu = jnp.sum(t, axis=-1, keepdims=True) * inv_c
            var = jnp.sum(t * t, axis=-1, keepdims=True) * inv_c - mu * mu
            var = jnp.maximum(var, 0.0)
            return (t - mu) * jax.lax.rsqrt(var + 1e-5) * g + b

        xn = layer_norm(x, g11, b11)        # == ln1_1(x) * (1/sqrt(Dh)) (fold)
        yn = layer_norm(y, g12, b12)        # == ln1_2(y)

        # --- fused projections: single wide GEMMs, bf16 operands, f32 accum ---
        q = jnp.dot(xn.astype(bf16), wqT_ref[...],
                    preferred_element_type=f32)                     # (Lq, Cp)
        kv = jnp.dot(yn.astype(bf16), wkvT_ref[...],
                     preferred_element_type=f32)                    # (Lk, 2*Cp)
        k = kv[:, :Cp]                                              # aligned split
        v = kv[:, Cp:]

        # --- cross multi-head attention: per-head grouped dots (K = Dh, not Cp)
        #     with flash-style online softmax over Lk chunks.  Eval mode: no
        #     attention dropout, no key padding mask. ---
        for h in range(H):                                          # static, small
            hsl = slice(h * Dh, (h + 1) * Dh)
            qh = q[:, hsl].astype(bf16)                             # (Lq, Dh)
            m_i = jnp.full((Lq, 1), -jnp.inf, f32)
            l_i = jnp.zeros((Lq, 1), f32)
            acc = jnp.zeros((Lq, Dh), f32)
            for c in range(n_kc):                                   # static
                lo = c * lk_chunk
                hi = min(Lk, lo + lk_chunk)
                kc = k[lo:hi, hsl].astype(bf16)                     # (hc, Dh)
                vc = v[lo:hi, hsl].astype(bf16)
                s = jax.lax.dot_general(qh, kc, (((1,), (1,)), ((), ())),
                                        preferred_element_type=f32)  # (Lq, hc)
                m_new = jnp.maximum(m_i, jnp.max(s, axis=-1, keepdims=True))
                alpha = jnp.exp(m_i - m_new)
                p = jnp.exp(s - m_new)
                l_i = alpha * l_i + jnp.sum(p, axis=-1, keepdims=True)
                acc = alpha * acc + jnp.dot(p.astype(bf16), vc,
                                            preferred_element_type=f32)
                m_i = m_new
            # Assemble this head's output lanes in the VMEM scratch (no concat).
            attn_ref[:, hsl] = acc * pl.reciprocal(l_i, approx=True)

        attn_out = jnp.dot(attn_ref[...].astype(bf16), woT_ref[...],
                           preferred_element_type=f32)              # (Lq, Cp)
        x1 = x + attn_out                                           # residual 1

        # --- MLP: Linear -> GELU(exact) -> (Dropout p=0) -> Linear;
        #     hidden dimension processed in lane-aligned chunks. ---
        x2n = layer_norm(x1, g2, b2l).astype(bf16)
        mlp = jnp.zeros((Lq, Coutp), f32)
        for c in range(n_hc):                                       # static
            lo = c * hid_chunk
            hi = min(Cmp, lo + hid_chunk)
            hid = jnp.dot(x2n, w1T_ref[:, lo:hi],
                          preferred_element_type=f32) + b1_ref[:, lo:hi]
            hid = _gelu_exact(hid)
            mlp = mlp + jnp.dot(hid.astype(bf16), w2T_ref[lo:hi, :],
                                preferred_element_type=f32)
        mlp = mlp + b2_ref[...]

        res = x1 + mlp if add_residual else mlp
        out_ref[0] = res.astype(out_ref.dtype)       # unmasked, lane-dense store

    return kernel


# ---------------------------------------------------------------------------
# Wrapper: one-time weight packing + per-call pallas_call
# ---------------------------------------------------------------------------
def _round_up(n, m):
    return ((n + m - 1) // m) * m


def _pad2(a, rows, cols):
    r, c = rows - a.shape[0], cols - a.shape[1]
    if r == 0 and c == 0:
        return a
    return jnp.pad(a, ((0, r), (0, c)))


def _vmem_limit_bytes():
    # ~3/4 of physical VMEM: ~96 MiB on v5e/v6e (128 MiB), ~48 MiB on v7x (64 MiB).
    try:
        cap = pltpu.get_tpu_info().vmem_capacity_bytes
        return int(min(cap * 3 // 4, 100 * 1024 * 1024))
    except Exception:
        return 48 * 1024 * 1024


def _const_spec(shape):
    # Constant-index operands (weights / biases / LN params): single-buffered --
    # the block index never changes, so double-buffering only doubles VMEM use.
    idx = lambda b: (0,) * len(shape)
    try:
        return pl.BlockSpec(shape, idx, pipeline_mode=pl.Buffered(1))
    except Exception:  # older JAX without pipeline_mode: default double-buffering
        return pl.BlockSpec(shape, idx)


def pack_params(params, n_heads):
    """One-time weight repacking (transpose / pad / concat / scale-fold / cast).

    Call at parameter-load time; the per-call hot path is then just the
    activation pad/cast plus the single fused pallas_call.
    """
    C = params["in_proj_weight"].shape[1]
    Cm = params["w1"].shape[0]
    C_out = params["w2"].shape[0]
    assert params["w1"].shape[1] == C and C % n_heads == 0
    Dh = C // n_heads
    add_residual = (C == C_out)

    Cp = _round_up(C, LANE)
    Cmp = _round_up(Cm, LANE)
    Coutp = Cp if add_residual else _round_up(C_out, LANE)

    f32, bf16 = jnp.float32, jnp.bfloat16
    scale = 1.0 / math.sqrt(Dh)

    # 3 LayerNorms packed as rows of one (6, Cp) f32 array; the attention
    # 1/sqrt(Dh) is folded into ln1_1 (its output only feeds the q projection).
    ln = jnp.stack([params["ln1_1_g"] * scale, params["ln1_1_b"] * scale,
                    params["ln1_2_g"], params["ln1_2_b"],
                    params["ln2_g"], params["ln2_b"]], axis=0).astype(f32)
    ln = _pad2(ln, 6, Cp)

    # nn.MultiheadAttention in_proj_weight is (3C, C) = [Wq; Wk; Wv].
    w_in = params["in_proj_weight"].astype(f32)
    wqT = _pad2(w_in[:C].T, Cp, Cp)
    wkT = _pad2(w_in[C:2 * C].T, Cp, Cp)
    wvT = _pad2(w_in[2 * C:].T, Cp, Cp)
    wkvT = jnp.concatenate([wkT, wvT], axis=1)          # (Cp, 2Cp); 128-aligned split
    woT = _pad2(params["out_proj_weight"].astype(f32).T, C, Cp)    # (C, Cp)

    w1T = _pad2(params["w1"].astype(f32).T, Cp, Cmp)               # (Cp, Cmp)
    b1 = _pad2(params["b1"].reshape(1, Cm).astype(f32), 1, Cmp)
    w2T = _pad2(params["w2"].astype(f32).T, Cmp, Coutp)            # (Cmp, Coutp)
    b2 = _pad2(params["b2"].reshape(1, C_out).astype(f32), 1, Coutp)

    packed = dict(ln=ln,
                  wqT=wqT.astype(bf16), wkvT=wkvT.astype(bf16), woT=woT.astype(bf16),
                  w1T=w1T.astype(bf16), b1=b1, w2T=w2T.astype(bf16), b2=b2)
    meta = dict(C=C, C_out=C_out, Cp=Cp, Cmp=Cmp, Coutp=Coutp,
                H=n_heads, Dh=Dh, add_residual=add_residual)
    return packed, meta


def transformer_block_cross(x, y, packed, meta, *, lk_chunk=512, hid_chunk=512):
    B, Lq, C = x.shape
    By, Lk, Cy = y.shape
    assert By == B and Cy == C and C == meta["C"]
    C_out = meta["C_out"]
    Cp, Cmp, Coutp = meta["Cp"], meta["Cmp"], meta["Coutp"]
    H, Dh, add_residual = meta["H"], meta["Dh"], meta["add_residual"]

    lk_chunk = max(8, _round_up(min(lk_chunk, Lk), 8))
    hid_chunk = max(LANE, _round_up(min(hid_chunk, Cmp), LANE))

    # Activations stream as bf16 (halves HBM<->VMEM traffic); channels are
    # zero-padded to a lane multiple so in-kernel loads/stores are lane-dense.
    # NOTE: v6e/v7x MXUs prefer 256-multiple contraction dims; size C/hidden
    # accordingly at the model level where possible.
    def prep(t):
        if C != Cp:
            t = jnp.pad(t, ((0, 0), (0, 0), (0, Cp - C)))
        return t.astype(jnp.bfloat16)

    xf, yf = prep(x), prep(y)

    kernel = _make_kernel(H, Dh, Lq, Lk, C, Cp, Cmp, add_residual,
                          lk_chunk, hid_chunk)

    in_specs = [
        pl.BlockSpec((1, Lq, Cp), lambda b: (b, 0, 0)),   # x rows (streamed bf16)
        pl.BlockSpec((1, Lk, Cp), lambda b: (b, 0, 0)),   # y rows (streamed bf16)
        _const_spec((6, Cp)),           # packed LN affine params      (f32)
        _const_spec((Cp, Cp)),          # Wq.T                         (bf16)
        _const_spec((Cp, 2 * Cp)),      # [Wk.T | Wv.T]                (bf16)
        _const_spec((C, Cp)),           # Wo.T                         (bf16)
        _const_spec((Cp, Cmp)),         # W1.T                         (bf16)
        _const_spec((1, Cmp)),          # b1                           (f32)
        _const_spec((Cmp, Coutp)),      # W2.T                         (bf16)
        _const_spec((1, Coutp)),        # b2                           (f32)
    ]
    out_spec = pl.BlockSpec((1, Lq, Coutp), lambda b: (b, 0, 0))

    out = pl.pallas_call(
        kernel,
        out_shape=jax.ShapeDtypeStruct((B, Lq, Coutp), x.dtype),
        grid=(B,),     # batch on the grid: >=2 parallel steps (both v7x cores
                       # busy) and x/y/out DMA pipelines against compute.
        in_specs=in_specs,
        out_specs=out_spec,
        scratch_shapes=[pltpu.VMEM((Lq, C), jnp.float32)],   # head-assembly buffer
        compiler_params=pltpu.CompilerParams(
            dimension_semantics=("parallel",),
            vmem_limit_bytes=_vmem_limit_bytes()),
    )(xf, yf, packed["ln"], packed["wqT"], packed["wkvT"], packed["woT"],
      packed["w1T"], packed["b1"], packed["w2T"], packed["b2"])

    return out[..., :C_out]


# ---------------------------------------------------------------------------
# Pure-JAX f32 reference (mirrors the PyTorch forward, eval mode)
# ---------------------------------------------------------------------------
def reference_forward(x, y, params, n_heads):
    B, Lq, C = x.shape
    _, Lk, _ = y.shape
    Dh = C // n_heads

    def ln(v, g, b):
        mu = v.mean(-1, keepdims=True)
        var = ((v - mu) ** 2).mean(-1, keepdims=True)
        return (v - mu) / jnp.sqrt(var + 1e-5) * g + b

    xn = ln(x, params["ln1_1_g"], params["ln1_1_b"])
    yn = ln(y, params["ln1_2_g"], params["ln1_2_b"])

    w_in = params["in_proj_weight"]
    wq, wk, wv = w_in[:C], w_in[C:2 * C], w_in[2 * C:]
    q = xn @ wq.T
    k = yn @ wk.T
    v = yn @ wv.T
    qh = q.reshape(B, Lq, n_heads, Dh).transpose(0, 2, 1, 3)
    kh = k.reshape(B, Lk, n_heads, Dh).transpose(0, 2, 1, 3)
    vh = v.reshape(B, Lk, n_heads, Dh).transpose(0, 2, 1, 3)
    s = jnp.einsum("bhqd,bhkd->bhqk", qh, kh) / math.sqrt(Dh)
    p = jax.nn.softmax(s, axis=-1)
    o = jnp.einsum("bhqk,bhkd->bhqd", p, vh).transpose(0, 2, 1, 3).reshape(B, Lq, C)
    attn = o @ params["out_proj_weight"].T
    x1 = x + attn

    x2n = ln(x1, params["ln2_g"], params["ln2_b"])
    h = x2n @ params["w1"].T + params["b1"]
    h = jax.nn.gelu(h, approximate=False)
    mlp = h @ params["w2"].T + params["b2"]
    return x1 + mlp if C == params["w2"].shape[0] else mlp


if __name__ == "__main__":
    # Small shapes: channels=32, 8 heads (head_dim=4), seq_q=8, seq_kv=16, batch=2.
    B, Lq, Lk, C, H = 2, 8, 16, 32, 8
    C_out = C   # channels == out_channels -> second residual branch is taken

    key = jax.random.PRNGKey(0)
    ks = jax.random.split(key, 12)
    x = jax.random.normal(ks[0], (B, Lq, C), jnp.float32)
    y = jax.random.normal(ks[1], (B, Lk, C), jnp.float32)

    params = {
        "ln1_1_g": 1.0 + 0.1 * jax.random.normal(ks[2], (C,), jnp.float32),
        "ln1_1_b": 0.1 * jax.random.normal(ks[3], (C,), jnp.float32),
        "ln1_2_g": 1.0 + 0.1 * jax.random.normal(ks[4], (C,), jnp.float32),
        "ln1_2_b": 0.1 * jax.random.normal(ks[5], (C,), jnp.float32),
        "ln2_g": 1.0 + 0.1 * jax.random.normal(ks[6], (C,), jnp.float32),
        "ln2_b": 0.1 * jax.random.normal(ks[7], (C,), jnp.float32),
        # MHA (bias=False): in_proj (3C, C), out_proj (C, C)
        "in_proj_weight": jax.random.normal(ks[8], (3 * C, C), jnp.float32)
                          / math.sqrt(C),
        "out_proj_weight": jax.random.normal(ks[9], (C, C), jnp.float32)
                           / math.sqrt(C),
        # MLP: Linear(C, 4C) -> GELU -> Linear(4C, C_out)
        "w1": jax.random.normal(ks[10], (4 * C, C), jnp.float32)
              * math.sqrt(2.0 / C),
        "b1": jnp.zeros((4 * C,), jnp.float32),
        "w2": jax.random.normal(ks[11], (C_out, 4 * C), jnp.float32)
              * math.sqrt(2.0 / (4 * C)),
        "b2": jnp.zeros((C_out,), jnp.float32),
    }

    packed, meta = pack_params(params, n_heads=H)   # one-time weight packing
    out = transformer_block_cross(x, y, packed, meta)
    out = jax.block_until_ready(out)

    with jax.default_matmul_precision("highest"):   # clean f32 baseline, no global side effect
        ref = reference_forward(x, y, params, n_heads=H)
        ref = jax.block_until_ready(ref)

    assert out.shape == (B, Lq, C_out)
    # Tolerance accounts for bf16 activation streaming + bf16 MXU operands
    # (f32 accumulation) vs the f32 reference.
    max_err = float(jnp.max(jnp.abs(out - ref)))
    if not jnp.allclose(out, ref, atol=1e-1, rtol=1e-1):
        raise AssertionError(f"kernel/reference mismatch, max abs diff = {max_err}")
    print("KERNEL_OK")
</pallas_src>

<mosaic_0001>
module attributes {stable_mosaic.version = 11 : i64} {
  func.func @kernel(%arg0: i32, %arg1: memref<1x8x128xbf16, #tpu.memory_space<vmem>>, %arg2: memref<1x16x128xbf16, #tpu.memory_space<vmem>>, %arg3: memref<6x128xf32, #tpu.memory_space<vmem>>, %arg4: memref<128x128xbf16, #tpu.memory_space<vmem>>, %arg5: memref<128x256xbf16, #tpu.memory_space<vmem>>, %arg6: memref<32x128xbf16, #tpu.memory_space<vmem>>, %arg7: memref<128x128xbf16, #tpu.memory_space<vmem>>, %arg8: memref<1x128xf32, #tpu.memory_space<vmem>>, %arg9: memref<128x128xbf16, #tpu.memory_space<vmem>>, %arg10: memref<1x128xf32, #tpu.memory_space<vmem>>, %arg11: memref<1x8x128xf32, #tpu.memory_space<vmem>>, %arg12: memref<8x32xf32, #tpu.memory_space<vmem>>) attributes {dimension_semantics = [#tpu.dimension_semantics<parallel>], iteration_bounds = array<i64: 2>, scalar_prefetch = 0 : i64, scratch_operands = 1 : i64, tpu.core_type = #tpu.core_type<tc>, window_params = [{transform_indices = @transform_0, window_bounds = array<i64: 1, 8, 128>}, {transform_indices = @transform_1, window_bounds = array<i64: 1, 16, 128>}, {pipeline_mode = #tpu.pipeline_mode<synchronous>, transform_indices = @transform_2, window_bounds = array<i64: 6, 128>}, {pipeline_mode = #tpu.pipeline_mode<synchronous>, transform_indices = @transform_3, window_bounds = array<i64: 128, 128>}, {pipeline_mode = #tpu.pipeline_mode<synchronous>, transform_indices = @transform_4, window_bounds = array<i64: 128, 256>}, {pipeline_mode = #tpu.pipeline_mode<synchronous>, transform_indices = @transform_5, window_bounds = array<i64: 32, 128>}, {pipeline_mode = #tpu.pipeline_mode<synchronous>, transform_indices = @transform_6, window_bounds = array<i64: 128, 128>}, {pipeline_mode = #tpu.pipeline_mode<synchronous>, transform_indices = @transform_7, window_bounds = array<i64: 1, 128>}, {pipeline_mode = #tpu.pipeline_mode<synchronous>, transform_indices = @transform_8, window_bounds = array<i64: 128, 128>}, {pipeline_mode = #tpu.pipeline_mode<synchronous>, transform_indices = @transform_9, window_bounds = array<i64: 1, 128>}, {transform_indices = @transform_10, window_bounds = array<i64: 1, 8, 128>}]} {
    %c0 = arith.constant 0 : index
    %c0_0 = arith.constant 0 : index
    %c0_1 = arith.constant 0 : index
    %0 = vector.load %arg1[%c0, %c0_0, %c0_1] : memref<1x8x128xbf16, #tpu.memory_space<vmem>>, vector<1x8x128xbf16>
    %1 = vector.shape_cast %0 : vector<1x8x128xbf16> to vector<8x128xbf16>
    %2 = arith.extf %1 : vector<8x128xbf16> to vector<8x128xf32>
    %c0_2 = arith.constant 0 : index
    %c0_3 = arith.constant 0 : index
    %c0_4 = arith.constant 0 : index
    %3 = vector.load %arg2[%c0_2, %c0_3, %c0_4] : memref<1x16x128xbf16, #tpu.memory_space<vmem>>, vector<1x16x128xbf16>
    %4 = vector.shape_cast %3 : vector<1x16x128xbf16> to vector<16x128xbf16>
    %5 = arith.extf %4 : vector<16x128xbf16> to vector<16x128xf32>
    %c0_5 = arith.constant 0 : index
    %c0_6 = arith.constant 0 : index
    %6 = vector.load %arg3[%c0_5, %c0_6] : memref<6x128xf32, #tpu.memory_space<vmem>>, vector<1x128xf32>
    %c1 = arith.constant 1 : index
    %c0_7 = arith.constant 0 : index
    %7 = vector.load %arg3[%c1, %c0_7] : memref<6x128xf32, #tpu.memory_space<vmem>>, vector<1x128xf32>
    %c2 = arith.constant 2 : index
    %c0_8 = arith.constant 0 : index
    %8 = vector.load %arg3[%c2, %c0_8] : memref<6x128xf32, #tpu.memory_space<vmem>>, vector<1x128xf32>
    %c3 = arith.constant 3 : index
    %c0_9 = arith.constant 0 : index
    %9 = vector.load %arg3[%c3, %c0_9] : memref<6x128xf32, #tpu.memory_space<vmem>>, vector<1x128xf32>
    %c4 = arith.constant 4 : index
    %c0_10 = arith.constant 0 : index
    %10 = vector.load %arg3[%c4, %c0_10] : memref<6x128xf32, #tpu.memory_space<vmem>>, vector<1x128xf32>
    %c5 = arith.constant 5 : index
    %c0_11 = arith.constant 0 : index
    %11 = vector.load %arg3[%c5, %c0_11] : memref<6x128xf32, #tpu.memory_space<vmem>>, vector<1x128xf32>
    %cst = arith.constant dense<0.000000e+00> : vector<8xf32>
    %12 = vector.multi_reduction <add>, %2, %cst [1] : vector<8x128xf32> to vector<8xf32>
    %13 = vector.shape_cast %12 : vector<8xf32> to vector<8x1xf32>
    %cst_12 = arith.constant 3.125000e-02 : f32
    %14 = vector.broadcast %cst_12 : f32 to vector<8x1xf32>
    %15 = arith.mulf %13, %14 : vector<8x1xf32>
    %16 = arith.mulf %2, %2 : vector<8x128xf32>
    %cst_13 = arith.constant dense<0.000000e+00> : vector<8xf32>
    %17 = vector.multi_reduction <add>, %16, %cst_13 [1] : vector<8x128xf32> to vector<8xf32>
    %18 = vector.shape_cast %17 : vector<8xf32> to vector<8x1xf32>
    %cst_14 = arith.constant 3.125000e-02 : f32
    %19 = vector.broadcast %cst_14 : f32 to vector<8x1xf32>
    %20 = arith.mulf %18, %19 : vector<8x1xf32>
    %21 = arith.mulf %15, %15 : vector<8x1xf32>
    %22 = arith.subf %20, %21 : vector<8x1xf32>
    %cst_15 = arith.constant 0.000000e+00 : f32
    %23 = vector.broadcast %cst_15 : f32 to vector<8x1xf32>
    %24 = arith.maximumf %22, %23 : vector<8x1xf32>
    %25 = vector.broadcast %15 : vector<8x1xf32> to vector<8x128xf32>
    %26 = arith.subf %2, %25 : vector<8x128xf32>
    %cst_16 = arith.constant 9.99999974E-6 : f32
    %27 = vector.broadcast %cst_16 : f32 to vector<8x1xf32>
    %28 = arith.addf %24, %27 : vector<8x1xf32>
    %29 = math.rsqrt %28 : vector<8x1xf32>
    %30 = vector.broadcast %29 : vector<8x1xf32> to vector<8x128xf32>
    %31 = arith.mulf %26, %30 : vector<8x128xf32>
    %32 = vector.broadcast %6 : vector<1x128xf32> to vector<8x128xf32>
    %33 = arith.mulf %31, %32 : vector<8x128xf32>
    %34 = vector.broadcast %7 : vector<1x128xf32> to vector<8x128xf32>
    %35 = arith.addf %33, %34 : vector<8x128xf32>
    %cst_17 = arith.constant dense<0.000000e+00> : vector<16xf32>
    %36 = vector.multi_reduction <add>, %5, %cst_17 [1] : vector<16x128xf32> to vector<16xf32>
    %37 = vector.shape_cast %36 : vector<16xf32> to vector<16x1xf32>
    %cst_18 = arith.constant 3.125000e-02 : f32
    %38 = vector.broadcast %cst_18 : f32 to vector<16x1xf32>
    %39 = arith.mulf %37, %38 : vector<16x1xf32>
    %40 = arith.mulf %5, %5 : vector<16x128xf32>
    %cst_19 = arith.constant dense<0.000000e+00> : vector<16xf32>
    %41 = vector.multi_reduction <add>, %40, %cst_19 [1] : vector<16x128xf32> to vector<16xf32>
    %42 = vector.shape_cast %41 : vector<16xf32> to vector<16x1xf32>
    %cst_20 = arith.constant 3.125000e-02 : f32
    %43 = vector.broadcast %cst_20 : f32 to vector<16x1xf32>
    %44 = arith.mulf %42, %43 : vector<16x1xf32>
    %45 = arith.mulf %39, %39 : vector<16x1xf32>
    %46 = arith.subf %44, %45 : vector<16x1xf32>
    %cst_21 = arith.constant 0.000000e+00 : f32
    %47 = vector.broadcast %cst_21 : f32 to vector<16x1xf32>
    %48 = arith.maximumf %46, %47 : vector<16x1xf32>
    %49 = vector.broadcast %39 : vector<16x1xf32> to vector<16x128xf32>
    %50 = arith.subf %5, %49 : vector<16x128xf32>
    %cst_22 = arith.constant 9.99999974E-6 : f32
    %51 = vector.broadcast %cst_22 : f32 to vector<16x1xf32>
    %52 = arith.addf %48, %51 : vector<16x1xf32>
    %53 = math.rsqrt %52 : vector<16x1xf32>
    %54 = vector.broadcast %53 : vector<16x1xf32> to vector<16x128xf32>
    %55 = arith.mulf %50, %54 : vector<16x128xf32>
    %56 = vector.broadcast %8 : vector<1x128xf32> to vector<16x128xf32>
    %57 = arith.mulf %55, %56 : vector<16x128xf32>
    %58 = vector.broadcast %9 : vector<1x128xf32> to vector<16x128xf32>
    %59 = arith.addf %57, %58 : vector<16x128xf32>
    %60 = arith.truncf %35 : vector<8x128xf32> to vector<8x128xbf16>
    %c0_23 = arith.constant 0 : index
    %c0_24 = arith.constant 0 : index
    %61 = vector.load %arg4[%c0_23, %c0_24] : memref<128x128xbf16, #tpu.memory_space<vmem>>, vector<128x128xbf16>
    %cst_25 = arith.constant dense<0.000000e+00> : vector<8x128xf32>
    %62 = tpu.matmul %60, %61, %cst_25 {dimension_numbers = #tpu.dot_dimension_numbers<[1], [0], [0], [1], [0, 0, 1, 1], [], []>} : vector<8x128xbf16>, vector<128x128xbf16>, vector<8x128xf32> -> vector<8x128xf32>
    %63 = arith.truncf %59 : vector<16x128xf32> to vector<16x128xbf16>
    %c0_26 = arith.constant 0 : index
    %c0_27 = arith.constant 0 : index
    %64 = vector.load %arg5[%c0_26, %c0_27] : memref<128x256xbf16, #tpu.memory_space<vmem>>, vector<128x256xbf16>
    %cst_28 = arith.constant dense<0.000000e+00> : vector<16x256xf32>
    %65 = tpu.matmul %63, %64, %cst_28 {dimension_numbers = #tpu.dot_dimension_numbers<[1], [0], [0], [1], [0, 0, 1, 1], [], []>} : vector<16x128xbf16>, vector<128x256xbf16>, vector<16x256xf32> -> vector<16x256xf32>
    %66 = vector.extract_strided_slice %65 {offsets = [0, 0], sizes = [16, 128], strides = [1, 1]} : vector<16x256xf32> to vector<16x128xf32>
    %67 = vector.extract_strided_slice %65 {offsets = [0, 128], sizes = [16, 128], strides = [1, 1]} : vector<16x256xf32> to vector<16x128xf32>
    %68 = vector.extract_strided_slice %62 {offsets = [0, 0], sizes = [8, 4], strides = [1, 1]} : vector<8x128xf32> to vector<8x4xf32>
    %69 = arith.truncf %68 : vector<8x4xf32> to vector<8x4xbf16>
    %cst_29 = arith.constant 0xFF800000 : f32
    %70 = vector.broadcast %cst_29 : f32 to vector<8x1xf32>
    %cst_30 = arith.constant 0.000000e+00 : f32
    %71 = vector.broadcast %cst_30 : f32 to vector<8x1xf32>
    %cst_31 = arith.constant 0.000000e+00 : f32
    %72 = vector.broadcast %cst_31 : f32 to vector<8x4xf32>
    %73 = vector.extract_strided_slice %66 {offsets = [0, 0], sizes = [16, 4], strides = [1, 1]} : vector<16x128xf32> to vector<16x4xf32>
    %74 = arith.truncf %73 : vector<16x4xf32> to vector<16x4xbf16>
    %75 = vector.extract_strided_slice %67 {offsets = [0, 0], sizes = [16, 4], strides = [1, 1]} : vector<16x128xf32> to vector<16x4xf32>
    %76 = arith.truncf %75 : vector<16x4xf32> to vector<16x4xbf16>
    %cst_32 = arith.constant dense<0.000000e+00> : vector<8x16xf32>
    %77 = tpu.matmul %69, %74, %cst_32 {dimension_numbers = #tpu.dot_dimension_numbers<[1], [1], [0], [0], [0, 0, 1, 0], [], []>} : vector<8x4xbf16>, vector<16x4xbf16>, vector<8x16xf32> -> vector<8x16xf32>
    %cst_33 = arith.constant dense<0xFF800000> : vector<8xf32>
    %78 = vector.multi_reduction <maximumf>, %77, %cst_33 [1] : vector<8x16xf32> to vector<8xf32>
    %79 = vector.shape_cast %78 : vector<8xf32> to vector<8x1xf32>
    %80 = arith.maximumf %70, %79 : vector<8x1xf32>
    %81 = arith.subf %70, %80 : vector<8x1xf32>
    %82 = math.exp %81 : vector<8x1xf32>
    %83 = vector.broadcast %80 : vector<8x1xf32> to vector<8x16xf32>
    %84 = arith.subf %77, %83 : vector<8x16xf32>
    %85 = math.exp %84 : vector<8x16xf32>
    %86 = arith.mulf %82, %71 : vector<8x1xf32>
    %cst_34 = arith.constant dense<0.000000e+00> : vector<8xf32>
    %87 = vector.multi_reduction <add>, %85, %cst_34 [1] : vector<8x16xf32> to vector<8xf32>
    %88 = vector.shape_cast %87 : vector<8xf32> to vector<8x1xf32>
    %89 = arith.addf %86, %88 : vector<8x1xf32>
    %90 = vector.broadcast %82 : vector<8x1xf32> to vector<8x4xf32>
    %91 = arith.mulf %90, %72 : vector<8x4xf32>
    %92 = arith.truncf %85 : vector<8x16xf32> to vector<8x16xbf16>
    %cst_35 = arith.constant dense<0.000000e+00> : vector<8x4xf32>
    %93 = tpu.matmul %92, %76, %cst_35 {dimension_numbers = #tpu.dot_dimension_numbers<[1], [0], [0], [1], [0, 0, 1, 1], [], []>} : vector<8x16xbf16>, vector<16x4xbf16>, vector<8x4xf32> -> vector<8x4xf32>
    %94 = arith.addf %91, %93 : vector<8x4xf32>
    %95 = tpu.reciprocal %89 {approx = true} : vector<8x1xf32> -> vector<8x1xf32>
    %96 = vector.broadcast %95 : vector<8x1xf32> to vector<8x4xf32>
    %97 = arith.mulf %94, %96 : vector<8x4xf32>
    %c0_36 = arith.constant 0 : index
    %c0_37 = arith.constant 0 : index
    %98 = vector.load %arg12[%c0_36, %c0_37] : memref<8x32xf32, #tpu.memory_space<vmem>>, vector<8x4xf32>
    tpu.vector_store %arg12[%c0_36, %c0_37], %97 {strides = array<i32>} : memref<8x32xf32, #tpu.memory_space<vmem>>, vector<8x4xf32>,
    %99 = vector.extract_strided_slice %62 {offsets = [0, 4], sizes = [8, 4], strides = [1, 1]} : vector<8x128xf32> to vector<8x4xf32>
    %100 = arith.truncf %99 : vector<8x4xf32> to vector<8x4xbf16>
    %cst_38 = arith.constant 0xFF800000 : f32
    %101 = vector.broadcast %cst_38 : f32 to vector<8x1xf32>
    %cst_39 = arith.constant 0.000000e+00 : f32
    %102 = vector.broadcast %cst_39 : f32 to vector<8x1xf32>
    %cst_40 = arith.constant 0.000000e+00 : f32
    %103 = vector.broadcast %cst_40 : f32 to vector<8x4xf32>
    %104 = vector.extract_strided_slice %66 {offsets = [0, 4], sizes = [16, 4], strides = [1, 1]} : vector<16x128xf32> to vector<16x4xf32>
    %105 = arith.truncf %104 : vector<16x4xf32> to vector<16x4xbf16>
    %106 = vector.extract_strided_slice %67 {offsets = [0, 4], sizes = [16, 4], strides = [1, 1]} : vector<16x128xf32> to vector<16x4xf32>
    %107 = arith.truncf %106 : vector<16x4xf32> to vector<16x4xbf16>
    %cst_41 = arith.constant dense<0.000000e+00> : vector<8x16xf32>
    %108 = tpu.matmul %100, %105, %cst_41 {dimension_numbers = #tpu.dot_dimension_numbers<[1], [1], [0], [0], [0, 0, 1, 0], [], []>} : vector<8x4xbf16>, vector<16x4xbf16>, vector<8x16xf32> -> vector<8x16xf32>
    %cst_42 = arith.constant dense<0xFF800000> : vector<8xf32>
    %109 = vector.multi_reduction <maximumf>, %108, %cst_42 [1] : vector<8x16xf32> to vector<8xf32>
    %110 = vector.shape_cast %109 : vector<8xf32> to vector<8x1xf32>
    %111 = arith.maximumf %101, %110 : vector<8x1xf32>
    %112 = arith.subf %101, %111 : vector<8x1xf32>
    %113 = math.exp %112 : vector<8x1xf32>
    %114 = vector.broadcast %111 : vector<8x1xf32> to vector<8x16xf32>
    %115 = arith.subf %108, %114 : vector<8x16xf32>
    %116 = math.exp %115 : vector<8x16xf32>
    %117 = arith.mulf %113, %102 : vector<8x1xf32>
    %cst_43 = arith.constant dense<0.000000e+00> : vector<8xf32>
    %118 = vector.multi_reduction <add>, %116, %cst_43 [1] : vector<8x16xf32> to vector<8xf32>
    %119 = vector.shape_cast %118 : vector<8xf32> to vector<8x1xf32>
    %120 = arith.addf %117, %119 : vector<8x1xf32>
    %121 = vector.broadcast %113 : vector<8x1xf32> to vector<8x4xf32>
    %122 = arith.mulf %121, %103 : vector<8x4xf32>
    %123 = arith.truncf %116 : vector<8x16xf32> to vector<8x16xbf16>
    %cst_44 = arith.constant dense<0.000000e+00> : vector<8x4xf32>
    %124 = tpu.matmul %123, %107, %cst_44 {dimension_numbers = #tpu.dot_dimension_numbers<[1], [0], [0], [1], [0, 0, 1, 1], [], []>} : vector<8x16xbf16>, vector<16x4xbf16>, vector<8x4xf32> -> vector<8x4xf32>
    %125 = arith.addf %122, %124 : vector<8x4xf32>
    %126 = tpu.reciprocal %120 {approx = true} : vector<8x1xf32> -> vector<8x1xf32>
    %127 = vector.broadcast %126 : vector<8x1xf32> to vector<8x4xf32>
    %128 = arith.mulf %125, %127 : vector<8x4xf32>
    %c0_45 = arith.constant 0 : index
    %c4_46 = arith.constant 4 : index
    %129 = vector.load %arg12[%c0_45, %c4_46] : memref<8x32xf32, #tpu.memory_space<vmem>>, vector<8x4xf32>
    tpu.vector_store %arg12[%c0_45, %c4_46], %128 {strides = array<i32>} : memref<8x32xf32, #tpu.memory_space<vmem>>, vector<8x4xf32>,
    %130 = vector.extract_strided_slice %62 {offsets = [0, 8], sizes = [8, 4], strides = [1, 1]} : vector<8x128xf32> to vector<8x4xf32>
    %131 = arith.truncf %130 : vector<8x4xf32> to vector<8x4xbf16>
    %cst_47 = arith.constant 0xFF800000 : f32
    %132 = vector.broadcast %cst_47 : f32 to vector<8x1xf32>
    %cst_48 = arith.constant 0.000000e+00 : f32
    %133 = vector.broadcast %cst_48 : f32 to vector<8x1xf32>
    %cst_49 = arith.constant 0.000000e+00 : f32
    %134 = vector.broadcast %cst_49 : f32 to vector<8x4xf32>
    %135 = vector.extract_strided_slice %66 {offsets = [0, 8], sizes = [16, 4], strides = [1, 1]} : vector<16x128xf32> to vector<16x4xf32>
    %136 = arith.truncf %135 : vector<16x4xf32> to vector<16x4xbf16>
    %137 = vector.extract_strided_slice %67 {offsets = [0, 8], sizes = [16, 4], strides = [1, 1]} : vector<16x128xf32> to vector<16x4xf32>
    %138 = arith.truncf %137 : vector<16x4xf32> to vector<16x4xbf16>
    %cst_50 = arith.constant dense<0.000000e+00> : vector<8x16xf32>
    %139 = tpu.matmul %131, %136, %cst_50 {dimension_numbers = #tpu.dot_dimension_numbers<[1], [1], [0], [0], [0, 0, 1, 0], [], []>} : vector<8x4xbf16>, vector<16x4xbf16>, vector<8x16xf32> -> vector<8x16xf32>
    %cst_51 = arith.constant dense<0xFF800000> : vector<8xf32>
    %140 = vector.multi_reduction <maximumf>, %139, %cst_51 [1] : vector<8x16xf32> to vector<8xf32>
    %141 = vector.shape_cast %140 : vector<8xf32> to vector<8x1xf32>
    %142 = arith.maximumf %132, %141 : vector<8x1xf32>
    %143 = arith.subf %132, %142 : vector<8x1xf32>
    %144 = math.exp %143 : vector<8x1xf32>
    %145 = vector.broadcast %142 : vector<8x1xf32> to vector<8x16xf32>
    %146 = arith.subf %139, %145 : vector<8x16xf32>
    %147 = math.exp %146 : vector<8x16xf32>
    %148 = arith.mulf %144, %133 : vector<8x1xf32>
    %cst_52 = arith.constant dense<0.000000e+00> : vector<8xf32>
    %149 = vector.multi_reduction <add>, %147, %cst_52 [1] : vector<8x16xf32> to vector<8xf32>
    %150 = vector.shape_cast %149 : vector<8xf32> to vector<8x1xf32>
    %151 = arith.addf %148, %150 : vector<8x1xf32>
    %152 = vector.broadcast %144 : vector<8x1xf32> to vector<8x4xf32>
    %153 = arith.mulf %152, %134 : vector<8x4xf32>
    %154 = arith.truncf %147 : vector<8x16xf32> to vector<8x16xbf16>
    %cst_53 = arith.constant dense<0.000000e+00> : vector<8x4xf32>
    %155 = tpu.matmul %154, %138, %cst_53 {dimension_numbers = #tpu.dot_dimension_numbers<[1], [0], [0], [1], [0, 0, 1, 1], [], []>} : vector<8x16xbf16>, vector<16x4xbf16>, vector<8x4xf32> -> vector<8x4xf32>
    %156 = arith.addf %153, %155 : vector<8x4xf32>
    %157 = tpu.reciprocal %151 {approx = true} : vector<8x1xf32> -> vector<8x1xf32>
    %158 = vector.broadcast %157 : vector<8x1xf32> to vector<8x4xf32>
    %159 = arith.mulf %156, %158 : vector<8x4xf32>
    %c0_54 = arith.constant 0 : index
    %c8 = arith.constant 8 : index
    %160 = vector.load %arg12[%c0_54, %c8] : memref<8x32xf32, #tpu.memory_space<vmem>>, vector<8x4xf32>
    tpu.vector_store %arg12[%c0_54, %c8], %159 {strides = array<i32>} : memref<8x32xf32, #tpu.memory_space<vmem>>, vector<8x4xf32>,
    %161 = vector.extract_strided_slice %62 {offsets = [0, 12], sizes = [8, 4], strides = [1, 1]} : vector<8x128xf32> to vector<8x4xf32>
    %162 = arith.truncf %161 : vector<8x4xf32> to vector<8x4xbf16>
    %cst_55 = arith.constant 0xFF800000 : f32
    %163 = vector.broadcast %cst_55 : f32 to vector<8x1xf32>
    %cst_56 = arith.constant 0.000000e+00 : f32
    %164 = vector.broadcast %cst_56 : f32 to vector<8x1xf32>
    %cst_57 = arith.constant 0.000000e+00 : f32
    %165 = vector.broadcast %cst_57 : f32 to vector<8x4xf32>
    %166 = vector.extract_strided_slice %66 {offsets = [0, 12], sizes = [16, 4], strides = [1, 1]} : vector<16x128xf32> to vector<16x4xf32>
    %167 = arith.truncf %166 : vector<16x4xf32> to vector<16x4xbf16>
    %168 = vector.extract_strided_slice %67 {offsets = [0, 12], sizes = [16, 4], strides = [1, 1]} : vector<16x128xf32> to vector<16x4xf32>
    %169 = arith.truncf %168 : vector<16x4xf32> to vector<16x4xbf16>
    %cst_58 = arith.constant dense<0.000000e+00> : vector<8x16xf32>
    %170 = tpu.matmul %162, %167, %cst_58 {dimension_numbers = #tpu.dot_dimension_numbers<[1], [1], [0], [0], [0, 0, 1, 0], [], []>} : vector<8x4xbf16>, vector<16x4xbf16>, vector<8x16xf32> -> vector<8x16xf32>
    %cst_59 = arith.constant dense<0xFF800000> : vector<8xf32>
    %171 = vector.multi_reduction <maximumf>, %170, %cst_59 [1] : vector<8x16xf32> to vector<8xf32>
    %172 = vector.shape_cast %171 : vector<8xf32> to vector<8x1xf32>
    %173 = arith.maximumf %163, %172 : vector<8x1xf32>
    %174 = arith.subf %163, %173 : vector<8x1xf32>
    %175 = math.exp %174 : vector<8x1xf32>
    %176 = vector.broadcast %173 : vector<8x1xf32> to vector<8x16xf32>
    %177 = arith.subf %170, %176 : vector<8x16xf32>
    %178 = math.exp %177 : vector<8x16xf32>
    %179 = arith.mulf %175, %164 : vector<8x1xf32>
    %cst_60 = arith.constant dense<0.000000e+00> : vector<8xf32>
    %180 = vector.multi_reduction <add>, %178, %cst_60 [1] : vector<8x16xf32> to vector<8xf32>
    %181 = vector.shape_cast %180 : vector<8xf32> to vector<8x1xf32>
    %182 = arith.addf %179, %181 : vector<8x1xf32>
    %183 = vector.broadcast %175 : vector<8x1xf32> to vector<8x4xf32>
    %184 = arith.mulf %183, %165 : vector<8x4xf32>
    %185 = arith.truncf %178 : vector<8x16xf32> to vector<8x16xbf16>
    %cst_61 = arith.constant dense<0.000000e+00> : vector<8x4xf32>
    %186 = tpu.matmul %185, %169, %cst_61 {dimension_numbers = #tpu.dot_dimension_numbers<[1], [0], [0], [1], [0, 0, 1, 1], [], []>} : vector<8x16xbf16>, vector<16x4xbf16>, vector<8x4xf32> -> vector<8x4xf32>
    %187 = arith.addf %184, %186 : vector<8x4xf32>
    %188 = tpu.reciprocal %182 {approx = true} : vector<8x1xf32> -> vector<8x1xf32>
    %189 = vector.broadcast %188 : vector<8x1xf32> to vector<8x4xf32>
    %190 = arith.mulf %187, %189 : vector<8x4xf32>
    %c0_62 = arith.constant 0 : index
    %c12 = arith.constant 12 : index
    %191 = vector.load %arg12[%c0_62, %c12] : memref<8x32xf32, #tpu.memory_space<vmem>>, vector<8x4xf32>
    tpu.vector_store %arg12[%c0_62, %c12], %190 {strides = array<i32>} : memref<8x32xf32, #tpu.memory_space<vmem>>, vector<8x4xf32>,
    %192 = vector.extract_strided_slice %62 {offsets = [0, 16], sizes = [8, 4], strides = [1, 1]} : vector<8x128xf32> to vector<8x4xf32>
    %193 = arith.truncf %192 : vector<8x4xf32> to vector<8x4xbf16>
    %cst_63 = arith.constant 0xFF800000 : f32
    %194 = vector.broadcast %cst_63 : f32 to vector<8x1xf32>
    %cst_64 = arith.constant 0.000000e+00 : f32
    %195 = vector.broadcast %cst_64 : f32 to vector<8x1xf32>
    %cst_65 = arith.constant 0.000000e+00 : f32
    %196 = vector.broadcast %cst_65 : f32 to vector<8x4xf32>
    %197 = vector.extract_strided_slice %66 {offsets = [0, 16], sizes = [16, 4], strides = [1, 1]} : vector<16x128xf32> to vector<16x4xf32>
    %198 = arith.truncf %197 : vector<16x4xf32> to vector<16x4xbf16>
    %199 = vector.extract_strided_slice %67 {offsets = [0, 16], sizes = [16, 4], strides = [1, 1]} : vector<16x128xf32> to vector<16x4xf32>
    %200 = arith.truncf %199 : vector<16x4xf32> to vector<16x4xbf16>
    %cst_66 = arith.constant dense<0.000000e+00> : vector<8x16xf32>
    %201 = tpu.matmul %193, %198, %cst_66 {dimension_numbers = #tpu.dot_dimension_numbers<[1], [1], [0], [0], [0, 0, 1, 0], [], []>} : vector<8x4xbf16>, vector<16x4xbf16>, vector<8x16xf32> -> vector<8x16xf32>
    %cst_67 = arith.constant dense<0xFF800000> : vector<8xf32>
    %202 = vector.multi_reduction <maximumf>, %201, %cst_67 [1] : vector<8x16xf32> to vector<8xf32>
    %203 = vector.shape_cast %202 : vector<8xf32> to vector<8x1xf32>
    %204 = arith.maximumf %194, %203 : vector<8x1xf32>
    %205 = arith.subf %194, %204 : vector<8x1xf32>
    %206 = math.exp %205 : vector<8x1xf32>
    %207 = vector.broadcast %204 : vector<8x1xf32> to vector<8x16xf32>
    %208 = arith.subf %201, %207 : vector<8x16xf32>
    %209 = math.exp %208 : vector<8x16xf32>
    %210 = arith.mulf %206, %195 : vector<8x1xf32>
    %cst_68 = arith.constant dense<0.000000e+00> : vector<8xf32>
    %211 = vector.multi_reduction <add>, %209, %cst_68 [1] : vector<8x16xf32> to vector<8xf32>
    %212 = vector.shape_cast %211 : vector<8xf32> to vector<8x1xf32>
    %213 = arith.addf %210, %212 : vector<8x1xf32>
    %214 = vector.broadcast %206 : vector<8x1xf32> to vector<8x4xf32>
    %215 = arith.mulf %214, %196 : vector<8x4xf32>
    %216 = arith.truncf %209 : vector<8x16xf32> to vector<8x16xbf16>
    %cst_69 = arith.constant dense<0.000000e+00> : vector<8x4xf32>
    %217 = tpu.matmul %216, %200, %cst_69 {dimension_numbers = #tpu.dot_dimension_numbers<[1], [0], [0], [1], [0, 0, 1, 1], [], []>} : vector<8x16xbf16>, vector<16x4xbf16>, vector<8x4xf32> -> vector<8x4xf32>
    %218 = arith.addf %215, %217 : vector<8x4xf32>
    %219 = tpu.reciprocal %213 {approx = true} : vector<8x1xf32> -> vector<8x1xf32>
    %220 = vector.broadcast %219 : vector<8x1xf32> to vector<8x4xf32>
    %221 = arith.mulf %218, %220 : vector<8x4xf32>
    %c0_70 = arith.constant 0 : index
    %c16 = arith.constant 16 : index
    %222 = vector.load %arg12[%c0_70, %c16] : memref<8x32xf32, #tpu.memory_space<vmem>>, vector<8x4xf32>
    tpu.vector_store %arg12[%c0_70, %c16], %221 {strides = array<i32>} : memref<8x32xf32, #tpu.memory_space<vmem>>, vector<8x4xf32>,
    %223 = vector.extract_strided_slice %62 {offsets = [0, 20], sizes = [8, 4], strides = [1, 1]} : vector<8x128xf32> to vector<8x4xf32>
    %224 = arith.truncf %223 : vector<8x4xf32> to vector<8x4xbf16>
    %cst_71 = arith.constant 0xFF800000 : f32
    %225 = vector.broadcast %cst_71 : f32 to vector<8x1xf32>
    %cst_72 = arith.constant 0.000000e+00 : f32
    %226 = vector.broadcast %cst_72 : f32 to vector<8x1xf32>
    %cst_73 = arith.constant 0.000000e+00 : f32
    %227 = vector.broadcast %cst_73 : f32 to vector<8x4xf32>
    %228 = vector.extract_strided_slice %66 {offsets = [0, 20], sizes = [16, 4], strides = [1, 1]} : vector<16x128xf32> to vector<16x4xf32>
    %229 = arith.truncf %228 : vector<16x4xf32> to vector<16x4xbf16>
    %230 = vector.extract_strided_slice %67 {offsets = [0, 20], sizes = [16, 4], strides = [1, 1]} : vector<16x128xf32> to vector<16x4xf32>
    %231 = arith.truncf %230 : vector<16x4xf32> to vector<16x4xbf16>
    %cst_74 = arith.constant dense<0.000000e+00> : vector<8x16xf32>
    %232 = tpu.matmul %224, %229, %cst_74 {dimension_numbers = #tpu.dot_dimension_numbers<[1], [1], [0], [0], [0, 0, 1, 0], [], []>} : vector<8x4xbf16>, vector<16x4xbf16>, vector<8x16xf32> -> vector<8x16xf32>
    %cst_75 = arith.constant dense<0xFF800000> : vector<8xf32>
    %233 = vector.multi_reduction <maximumf>, %232, %cst_75 [1] : vector<8x16xf32> to vector<8xf32>
    %234 = vector.shape_cast %233 : vector<8xf32> to vector<8x1xf32>
    %235 = arith.maximumf %225, %234 : vector<8x1xf32>
    %236 = arith.subf %225, %235 : vector<8x1xf32>
    %237 = math.exp %236 : vector<8x1xf32>
    %238 = vector.broadcast %235 : vector<8x1xf32> to vector<8x16xf32>
    %239 = arith.subf %232, %238 : vector<8x16xf32>
    %240 = math.exp %239 : vector<8x16xf32>
    %241 = arith.mulf %237, %226 : vector<8x1xf32>
    %cst_76 = arith.constant dense<0.000000e+00> : vector<8xf32>
    %242 = vector.multi_reduction <add>, %240, %cst_76 [1] : vector<8x16xf32> to vector<8xf32>
    %243 = vector.shape_cast %242 : vector<8xf32> to vector<8x1xf32>
    %244 = arith.addf %241, %243 : vector<8x1xf32>
    %245 = vector.broadcast %237 : vector<8x1xf32> to vector<8x4xf32>
    %246 = arith.mulf %245, %227 : vector<8x4xf32>
    %247 = arith.truncf %240 : vector<8x16xf32> to vector<8x16xbf16>
    %cst_77 = arith.constant dense<0.000000e+00> : vector<8x4xf32>
    %248 = tpu.matmul %247, %231, %cst_77 {dimension_numbers = #tpu.dot_dimension_numbers<[1], [0], [0], [1], [0, 0, 1, 1], [], []>} : vector<8x16xbf16>, vector<16x4xbf16>, vector<8x4xf32> -> vector<8x4xf32>
    %249 = arith.addf %246, %248 : vector<8x4xf32>
    %250 = tpu.reciprocal %244 {approx = true} : vector<8x1xf32> -> vector<8x1xf32>
    %251 = vector.broadcast %250 : vector<8x1xf32> to vector<8x4xf32>
    %252 = arith.mulf %249, %251 : vector<8x4xf32>
    %c0_78 = arith.constant 0 : index
    %c20 = arith.constant 20 : index
    %253 = vector.load %arg12[%c0_78, %c20] : memref<8x32xf32, #tpu.memory_space<vmem>>, vector<8x4xf32>
    tpu.vector_store %arg12[%c0_78, %c20], %252 {strides = array<i32>} : memref<8x32xf32, #tpu.memory_space<vmem>>, vector<8x4xf32>,
    %254 = vector.extract_strided_slice %62 {offsets = [0, 24], sizes = [8, 4], strides = [1, 1]} : vector<8x128xf32> to vector<8x4xf32>
    %255 = arith.truncf %254 : vector<8x4xf32> to vector<8x4xbf16>
    %cst_79 = arith.constant 0xFF800000 : f32
    %256 = vector.broadcast %cst_79 : f32 to vector<8x1xf32>
    %cst_80 = arith.constant 0.000000e+00 : f32
    %257 = vector.broadcast %cst_80 : f32 to vector<8x1xf32>
    %cst_81 = arith.constant 0.000000e+00 : f32
    %258 = vector.broadcast %cst_81 : f32 to vector<8x4xf32>
    %259 = vector.extract_strided_slice %66 {offsets = [0, 24], sizes = [16, 4], strides = [1, 1]} : vector<16x128xf32> to vector<16x4xf32>
    %260 = arith.truncf %259 : vector<16x4xf32> to vector<16x4xbf16>
    %261 = vector.extract_strided_slice %67 {offsets = [0, 24], sizes = [16, 4], strides = [1, 1]} : vector<16x128xf32> to vector<16x4xf32>
    %262 = arith.truncf %261 : vector<16x4xf32> to vector<16x4xbf16>
    %cst_82 = arith.constant dense<0.000000e+00> : vector<8x16xf32>
    %263 = tpu.matmul %255, %260, %cst_82 {dimension_numbers = #tpu.dot_dimension_numbers<[1], [1], [0], [0], [0, 0, 1, 0], [], []>} : vector<8x4xbf16>, vector<16x4xbf16>, vector<8x16xf32> -> vector<8x16xf32>
    %cst_83 = arith.constant dense<0xFF800000> : vector<8xf32>
    %264 = vector.multi_reduction <maximumf>, %263, %cst_83 [1] : vector<8x16xf32> to vector<8xf32>
    %265 = vector.shape_cast %264 : vector<8xf32> to vector<8x1xf32>
    %266 = arith.maximumf %256, %265 : vector<8x1xf32>
    %267 = arith.subf %256, %266 : vector<8x1xf32>
    %268 = math.exp %267 : vector<8x1xf32>
    %269 = vector.broadcast %266 : vector<8x1xf32> to vector<8x16xf32>
    %270 = arith.subf %263, %269 : vector<8x16xf32>
    %271 = math.exp %270 : vector<8x16xf32>
    %272 = arith.mulf %268, %257 : vector<8x1xf32>
    %cst_84 = arith.constant dense<0.000000e+00> : vector<8xf32>
    %273 = vector.multi_reduction <add>, %271, %cst_84 [1] : vector<8x16xf32> to vector<8xf32>
    %274 = vector.shape_cast %273 : vector<8xf32> to vector<8x1xf32>
    %275 = arith.addf %272, %274 : vector<8x1xf32>
    %276 = vector.broadcast %268 : vector<8x1xf32> to vector<8x4xf32>
    %277 = arith.mulf %276, %258 : vector<8x4xf32>
    %278 = arith.truncf %271 : vector<8x16xf32> to vector<8x16xbf16>
    %cst_85 = arith.constant dense<0.000000e+00> : vector<8x4xf32>
    %279 = tpu.matmul %278, %262, %cst_85 {dimension_numbers = #tpu.dot_dimension_numbers<[1], [0], [0], [1], [0, 0, 1, 1], [], []>} : vector<8x16xbf16>, vector<16x4xbf16>, vector<8x4xf32> -> vector<8x4xf32>
    %280 = arith.addf %277, %279 : vector<8x4xf32>
    %281 = tpu.reciprocal %275 {approx = true} : vector<8x1xf32> -> vector<8x1xf32>
    %282 = vector.broadcast %281 : vector<8x1xf32> to vector<8x4xf32>
    %283 = arith.mulf %280, %282 : vector<8x4xf32>
    %c0_86 = arith.constant 0 : index
    %c24 = arith.constant 24 : index
    %284 = vector.load %arg12[%c0_86, %c24] : memref<8x32xf32, #tpu.memory_space<vmem>>, vector<8x4xf32>
    tpu.vector_store %arg12[%c0_86, %c24], %283 {strides = array<i32>} : memref<8x32xf32, #tpu.memory_space<vmem>>, vector<8x4xf32>,
    %285 = vector.extract_strided_slice %62 {offsets = [0, 28], sizes = [8, 4], strides = [1, 1]} : vector<8x128xf32> to vector<8x4xf32>
    %286 = arith.truncf %285 : vector<8x4xf32> to vector<8x4xbf16>
    %cst_87 = arith.constant 0xFF800000 : f32
    %287 = vector.broadcast %cst_87 : f32 to vector<8x1xf32>
    %cst_88 = arith.constant 0.000000e+00 : f32
    %288 = vector.broadcast %cst_88 : f32 to vector<8x1xf32>
    %cst_89 = arith.constant 0.000000e+00 : f32
    %289 = vector.broadcast %cst_89 : f32 to vector<8x4xf32>
    %290 = vector.extract_strided_slice %66 {offsets = [0, 28], sizes = [16, 4], strides = [1, 1]} : vector<16x128xf32> to vector<16x4xf32>
    %291 = arith.truncf %290 : vector<16x4xf32> to vector<16x4xbf16>
    %292 = vector.extract_strided_slice %67 {offsets = [0, 28], sizes = [16, 4], strides = [1, 1]} : vector<16x128xf32> to vector<16x4xf32>
    %293 = arith.truncf %292 : vector<16x4xf32> to vector<16x4xbf16>
    %cst_90 = arith.constant dense<0.000000e+00> : vector<8x16xf32>
    %294 = tpu.matmul %286, %291, %cst_90 {dimension_numbers = #tpu.dot_dimension_numbers<[1], [1], [0], [0], [0, 0, 1, 0], [], []>} : vector<8x4xbf16>, vector<16x4xbf16>, vector<8x16xf32> -> vector<8x16xf32>
    %cst_91 = arith.constant dense<0xFF800000> : vector<8xf32>
    %295 = vector.multi_reduction <maximumf>, %294, %cst_91 [1] : vector<8x16xf32> to vector<8xf32>
    %296 = vector.shape_cast %295 : vector<8xf32> to vector<8x1xf32>
    %297 = arith.maximumf %287, %296 : vector<8x1xf32>
    %298 = arith.subf %287, %297 : vector<8x1xf32>
    %299 = math.exp %298 : vector<8x1xf32>
    %300 = vector.broadcast %297 : vector<8x1xf32> to vector<8x16xf32>
    %301 = arith.subf %294, %300 : vector<8x16xf32>
    %302 = math.exp %301 : vector<8x16xf32>
    %303 = arith.mulf %299, %288 : vector<8x1xf32>
    %cst_92 = arith.constant dense<0.000000e+00> : vector<8xf32>
    %304 = vector.multi_reduction <add>, %302, %cst_92 [1] : vector<8x16xf32> to vector<8xf32>
    %305 = vector.shape_cast %304 : vector<8xf32> to vector<8x1xf32>
    %306 = arith.addf %303, %305 : vector<8x1xf32>
    %307 = vector.broadcast %299 : vector<8x1xf32> to vector<8x4xf32>
    %308 = arith.mulf %307, %289 : vector<8x4xf32>
    %309 = arith.truncf %302 : vector<8x16xf32> to vector<8x16xbf16>
    %cst_93 = arith.constant dense<0.000000e+00> : vector<8x4xf32>
    %310 = tpu.matmul %309, %293, %cst_93 {dimension_numbers = #tpu.dot_dimension_numbers<[1], [0], [0], [1], [0, 0, 1, 1], [], []>} : vector<8x16xbf16>, vector<16x4xbf16>, vector<8x4xf32> -> vector<8x4xf32>
    %311 = arith.addf %308, %310 : vector<8x4xf32>
    %312 = tpu.reciprocal %306 {approx = true} : vector<8x1xf32> -> vector<8x1xf32>
    %313 = vector.broadcast %312 : vector<8x1xf32> to vector<8x4xf32>
    %314 = arith.mulf %311, %313 : vector<8x4xf32>
    %c0_94 = arith.constant 0 : index
    %c28 = arith.constant 28 : index
    %315 = vector.load %arg12[%c0_94, %c28] : memref<8x32xf32, #tpu.memory_space<vmem>>, vector<8x4xf32>
    tpu.vector_store %arg12[%c0_94, %c28], %314 {strides = array<i32>} : memref<8x32xf32, #tpu.memory_space<vmem>>, vector<8x4xf32>,
    %c0_95 = arith.constant 0 : index
    %c0_96 = arith.constant 0 : index
    %316 = vector.load %arg12[%c0_95, %c0_96] : memref<8x32xf32, #tpu.memory_space<vmem>>, vector<8x32xf32>
    %317 = arith.truncf %316 : vector<8x32xf32> to vector<8x32xbf16>
    %c0_97 = arith.constant 0 : index
    %c0_98 = arith.constant 0 : index
    %318 = vector.load %arg6[%c0_97, %c0_98] : memref<32x128xbf16, #tpu.memory_space<vmem>>, vector<32x128xbf16>
    %cst_99 = arith.constant dense<0.000000e+00> : vector<8x128xf32>
    %319 = tpu.matmul %317, %318, %cst_99 {dimension_numbers = #tpu.dot_dimension_numbers<[1], [0], [0], [1], [0, 0, 1, 1], [], []>} : vector<8x32xbf16>, vector<32x128xbf16>, vector<8x128xf32> -> vector<8x128xf32>
    %320 = arith.addf %2, %319 : vector<8x128xf32>
    %cst_100 = arith.constant dense<0.000000e+00> : vector<8xf32>
    %321 = vector.multi_reduction <add>, %320, %cst_100 [1] : vector<8x128xf32> to vector<8xf32>
    %322 = vector.shape_cast %321 : vector<8xf32> to vector<8x1xf32>
    %cst_101 = arith.constant 3.125000e-02 : f32
    %323 = vector.broadcast %cst_101 : f32 to vector<8x1xf32>
    %324 = arith.mulf %322, %323 : vector<8x1xf32>
    %325 = arith.mulf %320, %320 : vector<8x128xf32>
    %cst_102 = arith.constant dense<0.000000e+00> : vector<8xf32>
    %326 = vector.multi_reduction <add>, %325, %cst_102 [1] : vector<8x128xf32> to vector<8xf32>
    %327 = vector.shape_cast %326 : vector<8xf32> to vector<8x1xf32>
    %cst_103 = arith.constant 3.125000e-02 : f32
    %328 = vector.broadcast %cst_103 : f32 to vector<8x1xf32>
    %329 = arith.mulf %327, %328 : vector<8x1xf32>
    %330 = arith.mulf %324, %324 : vector<8x1xf32>
    %331 = arith.subf %329, %330 : vector<8x1xf32>
    %cst_104 = arith.constant 0.000000e+00 : f32
    %332 = vector.broadcast %cst_104 : f32 to vector<8x1xf32>
    %333 = arith.maximumf %331, %332 : vector<8x1xf32>
    %334 = vector.broadcast %324 : vector<8x1xf32> to vector<8x128xf32>
    %335 = arith.subf %320, %334 : vector<8x128xf32>
    %cst_105 = arith.constant 9.99999974E-6 : f32
    %336 = vector.broadcast %cst_105 : f32 to vector<8x1xf32>
    %337 = arith.addf %333, %336 : vector<8x1xf32>
    %338 = math.rsqrt %337 : vector<8x1xf32>
    %339 = vector.broadcast %338 : vector<8x1xf32> to vector<8x128xf32>
    %340 = arith.mulf %335, %339 : vector<8x128xf32>
    %341 = vector.broadcast %10 : vector<1x128xf32> to vector<8x128xf32>
    %342 = arith.mulf %340, %341 : vector<8x128xf32>
    %343 = vector.broadcast %11 : vector<1x128xf32> to vector<8x128xf32>
    %344 = arith.addf %342, %343 : vector<8x128xf32>
    %345 = arith.truncf %344 : vector<8x128xf32> to vector<8x128xbf16>
    %cst_106 = arith.constant 0.000000e+00 : f32
    %346 = vector.broadcast %cst_106 : f32 to vector<8x128xf32>
    %c0_107 = arith.constant 0 : index
    %c0_108 = arith.constant 0 : index
    %347 = vector.load %arg7[%c0_107, %c0_108] : memref<128x128xbf16, #tpu.memory_space<vmem>>, vector<128x128xbf16>
    %cst_109 = arith.constant dense<0.000000e+00> : vector<8x128xf32>
    %348 = tpu.matmul %345, %347, %cst_109 {dimension_numbers = #tpu.dot_dimension_numbers<[1], [0], [0], [1], [0, 0, 1, 1], [], []>} : vector<8x128xbf16>, vector<128x128xbf16>, vector<8x128xf32> -> vector<8x128xf32>
    %c0_110 = arith.constant 0 : index
    %c0_111 = arith.constant 0 : index
    %349 = vector.load %arg8[%c0_110, %c0_111] : memref<1x128xf32, #tpu.memory_space<vmem>>, vector<1x128xf32>
    %350 = vector.broadcast %349 : vector<1x128xf32> to vector<8x128xf32>
    %351 = arith.addf %348, %350 : vector<8x128xf32>
    %cst_112 = arith.constant 5.000000e-01 : f32
    %352 = vector.broadcast %cst_112 : f32 to vector<8x128xf32>
    %353 = arith.mulf %352, %351 : vector<8x128xf32>
    %cst_113 = arith.constant 0.707106769 : f32
    %354 = vector.broadcast %cst_113 : f32 to vector<8x128xf32>
    %355 = arith.mulf %351, %354 : vector<8x128xf32>
    %cst_114 = arith.constant 0.000000e+00 : f32
    %356 = vector.broadcast %cst_114 : f32 to vector<8x128xf32>
    %357 = arith.cmpf oge, %355, %356 : vector<8x128xf32>
    %cst_115 = arith.constant 1.000000e+00 : f32
    %cst_116 = arith.constant -1.000000e+00 : f32
    %358 = vector.broadcast %cst_115 : f32 to vector<8x128xf32>
    %359 = vector.broadcast %cst_116 : f32 to vector<8x128xf32>
    %360 = arith.select %357, %358, %359 : vector<8x128xi1>, vector<8x128xf32>
    %361 = math.absf %355 : vector<8x128xf32>
    %cst_117 = arith.constant 0.327591091 : f32
    %362 = vector.broadcast %cst_117 : f32 to vector<8x128xf32>
    %363 = arith.mulf %362, %361 : vector<8x128xf32>
    %cst_118 = arith.constant 1.000000e+00 : f32
    %364 = vector.broadcast %cst_118 : f32 to vector<8x128xf32>
    %365 = arith.addf %364, %363 : vector<8x128xf32>
    %366 = tpu.reciprocal %365 {approx = true} : vector<8x128xf32> -> vector<8x128xf32>
    %cst_119 = arith.constant 1.06140542 : f32
    %367 = vector.broadcast %cst_119 : f32 to vector<8x128xf32>
    %368 = arith.mulf %366, %367 : vector<8x128xf32>
    %cst_120 = arith.constant -1.45315206 : f32
    %369 = vector.broadcast %cst_120 : f32 to vector<8x128xf32>
    %370 = arith.addf %369, %368 : vector<8x128xf32>
    %371 = arith.mulf %366, %370 : vector<8x128xf32>
    %cst_121 = arith.constant 1.42141378 : f32
    %372 = vector.broadcast %cst_121 : f32 to vector<8x128xf32>
    %373 = arith.addf %372, %371 : vector<8x128xf32>
    %374 = arith.mulf %366, %373 : vector<8x128xf32>
    %cst_122 = arith.constant -0.284496725 : f32
    %375 = vector.broadcast %cst_122 : f32 to vector<8x128xf32>
    %376 = arith.addf %375, %374 : vector<8x128xf32>
    %377 = arith.mulf %366, %376 : vector<8x128xf32>
    %cst_123 = arith.constant 0.254829586 : f32
    %378 = vector.broadcast %cst_123 : f32 to vector<8x128xf32>
    %379 = arith.addf %378, %377 : vector<8x128xf32>
    %380 = arith.mulf %366, %379 : vector<8x128xf32>
    %cst_124 = arith.constant 0.000000e+00 : f32
    %381 = vector.broadcast %cst_124 : f32 to vector<8x128xf32>
    %382 = arith.subf %381, %361 : vector<8x128xf32>
    %383 = arith.mulf %382, %361 : vector<8x128xf32>
    %384 = math.exp %383 : vector<8x128xf32>
    %385 = arith.mulf %380, %384 : vector<8x128xf32>
    %cst_125 = arith.constant 1.000000e+00 : f32
    %386 = vector.broadcast %cst_125 : f32 to vector<8x128xf32>
    %387 = arith.subf %386, %385 : vector<8x128xf32>
    %388 = arith.mulf %360, %387 : vector<8x128xf32>
    %cst_126 = arith.constant 1.000000e+00 : f32
    %389 = vector.broadcast %cst_126 : f32 to vector<8x128xf32>
    %390 = arith.addf %389, %388 : vector<8x128xf32>
    %391 = arith.mulf %353, %390 : vector<8x128xf32>
    %392 = arith.truncf %391 : vector<8x128xf32> to vector<8x128xbf16>
    %c0_127 = arith.constant 0 : index
    %c0_128 = arith.constant 0 : index
    %393 = vector.load %arg9[%c0_127, %c0_128] : memref<128x128xbf16, #tpu.memory_space<vmem>>, vector<128x128xbf16>
    %cst_129 = arith.constant dense<0.000000e+00> : vector<8x128xf32>
    %394 = tpu.matmul %392, %393, %cst_129 {dimension_numbers = #tpu.dot_dimension_numbers<[1], [0], [0], [1], [0, 0, 1, 1], [], []>} : vector<8x128xbf16>, vector<128x128xbf16>, vector<8x128xf32> -> vector<8x128xf32>
    %395 = arith.addf %346, %394 : vector<8x128xf32>
    %c0_130 = arith.constant 0 : index
    %c0_131 = arith.constant 0 : index
    %396 = vector.load %arg10[%c0_130, %c0_131] : memref<1x128xf32, #tpu.memory_space<vmem>>, vector<1x128xf32>
    %397 = vector.broadcast %396 : vector<1x128xf32> to vector<8x128xf32>
    %398 = arith.addf %395, %397 : vector<8x128xf32>
    %399 = arith.addf %320, %398 : vector<8x128xf32>
    %c0_132 = arith.constant 0 : index
    %c0_133 = arith.constant 0 : index
    %c0_134 = arith.constant 0 : index
    %400 = vector.load %arg11[%c0_132, %c0_133, %c0_134] : memref<1x8x128xf32, #tpu.memory_space<vmem>>, vector<1x8x128xf32>
    %401 = vector.shape_cast %400 : vector<1x8x128xf32> to vector<8x128xf32>
    %402 = vector.shape_cast %399 : vector<8x128xf32> to vector<1x8x128xf32>
    tpu.vector_store %arg11[%c0_132, %c0_133, %c0_134], %402 {strides = array<i32>} : memref<1x8x128xf32, #tpu.memory_space<vmem>>, vector<1x8x128xf32>,
    return
  }
  func.func @transform_0(%arg0: i32) -> (i32, i32, i32) {
    %c0_i32 = arith.constant 0 : i32
    %c0_i32_0 = arith.constant 0 : i32
    %c0_i32_1 = arith.constant 0 : i32
    return %arg0, %c0_i32, %c0_i32_0 : i32, i32, i32
  }
  func.func @transform_1(%arg0: i32) -> (i32, i32, i32) {
    %c0_i32 = arith.constant 0 : i32
    %c0_i32_0 = arith.constant 0 : i32
    %c0_i32_1 = arith.constant 0 : i32
    return %arg0, %c0_i32, %c0_i32_0 : i32, i32, i32
  }
  func.func @transform_2(%arg0: i32) -> (i32, i32) {
    %c0_i32 = arith.constant 0 : i32
    %c0_i32_0 = arith.constant 0 : i32
    %c0_i32_1 = arith.constant 0 : i32
    return %c0_i32, %c0_i32_0 : i32, i32
  }
  func.func @transform_3(%arg0: i32) -> (i32, i32) {
    %c0_i32 = arith.constant 0 : i32
    %c0_i32_0 = arith.constant 0 : i32
    %c0_i32_1 = arith.constant 0 : i32
    return %c0_i32, %c0_i32_0 : i32, i32
  }
  func.func @transform_4(%arg0: i32) -> (i32, i32) {
    %c0_i32 = arith.constant 0 : i32
    %c0_i32_0 = arith.constant 0 : i32
    %c0_i32_1 = arith.constant 0 : i32
    return %c0_i32, %c0_i32_0 : i32, i32
  }
  func.func @transform_5(%arg0: i32) -> (i32, i32) {
    %c0_i32 = arith.constant 0 : i32
    %c0_i32_0 = arith.constant 0 : i32
    %c0_i32_1 = arith.constant 0 : i32
    return %c0_i32, %c0_i32_0 : i32, i32
  }
  func.func @transform_6(%arg0: i32) -> (i32, i32) {
    %c0_i32 = arith.constant 0 : i32
    %c0_i32_0 = arith.constant 0 : i32
    %c0_i32_1 = arith.constant 0 : i32
    return %c0_i32, %c0_i32_0 : i32, i32
  }
  func.func @transform_7(%arg0: i32) -> (i32, i32) {
    %c0_i32 = arith.constant 0 : i32
    %c0_i32_0 = arith.constant 0 : i32
    %c0_i32_1 = arith.constant 0 : i32
    return %c0_i32, %c0_i32_0 : i32, i32
  }
  func.func @transform_8(%arg0: i32) -> (i32, i32) {
    %c0_i32 = arith.constant 0 : i32
    %c0_i32_0 = arith.constant 0 : i32
    %c0_i32_1 = arith.constant 0 : i32
    return %c0_i32, %c0_i32_0 : i32, i32
  }
  func.func @transform_9(%arg0: i32) -> (i32, i32) {
    %c0_i32 = arith.constant 0 : i32
    %c0_i32_0 = arith.constant 0 : i32
    %c0_i32_1 = arith.constant 0 : i32
    return %c0_i32, %c0_i32_0 : i32, i32
  }
  func.func @transform_10(%arg0: i32) -> (i32, i32, i32) {
    %c0_i32 = arith.constant 0 : i32
    %c0_i32_0 = arith.constant 0 : i32
    %c0_i32_1 = arith.constant 0 : i32
    return %arg0, %c0_i32, %c0_i32_0 : i32, i32, i32
  }
}

</mosaic_0001>

<llo_original>
// kernel: tpu_custom_call.1
$region0: #{tpu_custom_call.1}
  #allocation0 [shape = 'u32[]', space=smem, size = 0x4, offset = 0x4, fixed_abs, tag = 'smem constant byte address 0x4 - core index']
  #allocation1 [shape = 'u32[144,128]{1,0:T(1,128)}', space=vmem, size = 0x12000, scoped, tag = 'internal scratch']
  #allocation2 [shape = 'f32[8,32]{1,0:T(8,128)}', space=vmem, size = 0x1000, scoped, tag = 'scratch operand']
  %s0 = inlined_call_operand.hbm [shape: bf16[2,8,128], index: 0, kind: input, shape index: {}]
  %s1 = inlined_call_operand.hbm [shape: bf16[2,16,128], index: 1, kind: input, shape index: {}]
  %s2 = inlined_call_operand.hbm [shape: f32[6,128], index: 2, kind: input, shape index: {}]
  %s3 = inlined_call_operand.hbm [shape: bf16[128,128], index: 3, kind: input, shape index: {}]
  %s4 = inlined_call_operand.hbm [shape: bf16[128,256], index: 4, kind: input, shape index: {}]
  %s5 = inlined_call_operand.vmem [shape: bf16[32,128], index: 5, kind: input, shape index: {}]
  %s6 = inlined_call_operand.hbm [shape: bf16[128,128], index: 6, kind: input, shape index: {}]
  %s7 = inlined_call_operand.vmem [shape: f32[1,128], index: 7, kind: input, shape index: {}]
  %s8 = inlined_call_operand.hbm [shape: bf16[128,128], index: 8, kind: input, shape index: {}]
  %s9 = inlined_call_operand.vmem [shape: f32[1,128], index: 9, kind: input, shape index: {}]
  %s10 = inlined_call_operand.hbm [shape: f32[2,8,128], index: 10, kind: output, shape index: {}]
  %s11 = sld [smem:[#allocation0]]
  $region101: #{tpu_custom_call.1} parent=0
    _
  %s13 = ssub.s32 1, %s11
  %s14 = scalar_select 0, %s13, %s11
  $region1: #{tpu_custom_call.1} parent=0
    #allocation3 [shape = 'u8[4096]{0}', space=vmem, size = 0x1000, scoped, tag = 'input window, operand 0']
    #allocation4 [shape = 's32[2]{0}', space=sflag, size = 0x8, scoped, tag = 'scoped memory for tpu_custom_call.1']
    #allocation5 [shape = 's32[2]{0}', space=sflag, size = 0x8, scoped, tag = 'scoped memory for tpu_custom_call.1']
    #allocation6 [shape = 'u8[8192]{0}', space=vmem, size = 0x2000, scoped, tag = 'input window, operand 1']
    #allocation7 [shape = 's32[2]{0}', space=sflag, size = 0x8, scoped, tag = 'scoped memory for tpu_custom_call.1']
    #allocation8 [shape = 'u8[4096]{0}', space=vmem, size = 0x1000, scoped, tag = 'input window, operand 2, single buffered']
    #allocation9 [shape = 'u8[32768]{0}', space=vmem, size = 0x8000, scoped, tag = 'input window, operand 3, single buffered']
    #allocation10 [shape = 's32[1]{0}', space=sflag, size = 0x4, scoped, tag = 'scoped memory for tpu_custom_call.1']
    #allocation11 [shape = 'u8[65536]{0}', space=vmem, size = 0x10000, scoped, tag = 'input window, operand 4, single buffered']
    #allocation12 [shape = 'u8[32768]{0}', space=vmem, size = 0x8000, scoped, tag = 'input window, operand 6, single buffered']
    #allocation13 [shape = 's32[1]{0}', space=sflag, size = 0x4, scoped, tag = 'scoped memory for tpu_custom_call.1']
    #allocation14 [shape = 'u8[32768]{0}', space=vmem, size = 0x8000, scoped, tag = 'input window, operand 8, single buffered']
    #allocation15 [shape = 'u8[8192]{0}', space=vmem, size = 0x2000, scoped, tag = 'output window, operand 0']
    %15 = vsyncpa [#allocation4], 0
    %s16 = scalar_lea.sflag [#allocation4], 1
    %17 = vsyncpa %s16, 0
    %18 = vsyncpa [#allocation7], 0
    %s19 = scalar_lea.sflag [#allocation7], 1
    %20 = vsyncpa %s19, 0
    %21 = vsyncpa [#allocation10], 0
    %22 = vsyncpa [#allocation13], 0
    %23 = vsyncpa [#allocation5], 0
    %s24 = scalar_lea.sflag [#allocation5], 1
    %25 = vsyncpa %s24, 0
    loop: start=0, step=1, limit=4
    $region2: #{tpu_custom_call.1} parent=1 // loop_pre_header
      _
    $region3: #{tpu_custom_call.1} parent=1 // loop_header
      %s27 = sphi 0, %s31
      %p28 = scmp.ge.s32.totalorder %s27, 4
      %s37 = sphi 0, %s39
      %s40 = sphi 0, %s37
      %s41 = sphi 0, %s40
      %s57 = sphi 0, %s41
      %s63 = sphi 0, %s65
      %s66 = sphi 0, %s63
      %s67 = sphi 0, %s66
      %s83 = sphi 0, %s67
      %s87 = sphi 0, %s87
      %s89 = sphi 0, %s87
      %s90 = sphi 0, %s89
      %s104 = sphi 0, %s90
      %s108 = sphi 0, %s108
      %s110 = sphi 0, %s108
      %s111 = sphi 0, %s110
      %s125 = sphi 0, %s111
      %s129 = sphi 0, %s129
      %s131 = sphi 0, %s129
      %s132 = sphi 0, %s131
      %s146 = sphi 0, %s132
      %s150 = sphi 0, %s150
      %s152 = sphi 0, %s150
      %s153 = sphi 0, %s152
      %s167 = sphi 0, %s153
      %s171 = sphi 0, %s171
      %s173 = sphi 0, %s171
      %s174 = sphi 0, %s173
      %s188 = sphi 0, %s174
      %s192 = sphi 0, %s192
      %s194 = sphi 0, %s192
      %s195 = sphi 0, %s194
      %s209 = sphi 0, %s195
      %s213 = sphi 0, %s213
      %s215 = sphi 0, %s213
      %s216 = sphi 0, %s215
      %s230 = sphi 0, %s216
      %s234 = sphi 0, %s234
      %s236 = sphi 0, %s234
      %s237 = sphi 0, %s236
      %s251 = sphi 0, %s237
      %s257 = sphi 0, %s259
      %s260 = sphi 0, %s257
      %s261 = sphi 0, %s260
      %s277 = sphi 0, %s261
    $region4: #{tpu_custom_call.1} parent=1 // loop_header_branch
      %30 = sbr.rel (%p28) target = $region8
    $region5: #{tpu_custom_call.1} parent=1 // loop_body
      %s32 = ssub.s32 %s27, 1
      %s33 = ssub.s32 %s27, 2
      %s34 = sadd.s32 %s27, 1
      %s35 = ssub.s32 %s27, %s34
      %p36 = scmp.eq.s32.totalorder %s35, 0
      %s38 = sadd.s32 %s37, 1
      %s39 = scalar_select %p36, %s37, %s38
      %p42 = pneg %p36
      %p43 = scmp.eq.s32.totalorder %s27, 1
      %p44 = por %p42, %p43
      %p45 = scmp.ne.s32.totalorder %s37, %s40
      %p46 = scmp.eq.s32.totalorder %s27, 0
      %p47 = por %p45, %p46
      %p48 = scmp.ne.s32.totalorder %s37, %s40
      %p49 = scmp.eq.s32.totalorder %s32, 1
      %p50 = por %p48, %p49
      %p51 = scmp.ne.s32.totalorder %s40, %s41
      %p52 = scmp.eq.s32.totalorder %s32, 0
      %p53 = por %p51, %p52
      %p54 = scmp.ne.s32.totalorder %s40, %s41
      %p55 = scmp.eq.s32.totalorder %s33, 1
      %p56 = por %p54, %p55
      %p58 = scmp.ne.s32.totalorder %s41, %s57
      %p59 = scmp.eq.s32.totalorder %s33, 0
      %p60 = por %p58, %p59
      %s61 = ssub.s32 %s27, %s34
      %p62 = scmp.eq.s32.totalorder %s61, 0
      %s64 = sadd.s32 %s63, 1
      %s65 = scalar_select %p62, %s63, %s64
      %p68 = pneg %p62
      %p69 = scmp.eq.s32.totalorder %s27, 1
      %p70 = por %p68, %p69
      %p71 = scmp.ne.s32.totalorder %s63, %s66
      %p72 = scmp.eq.s32.totalorder %s27, 0
      %p73 = por %p71, %p72
      %p74 = scmp.ne.s32.totalorder %s63, %s66
      %p75 = scmp.eq.s32.totalorder %s32, 1
      %p76 = por %p74, %p75
      %p77 = scmp.ne.s32.totalorder %s66, %s67
      %p78 = scmp.eq.s32.totalorder %s32, 0
      %p79 = por %p77, %p78
      %p80 = scmp.ne.s32.totalorder %s66, %s67
      %p81 = scmp.eq.s32.totalorder %s33, 1
      %p82 = por %p80, %p81
      %p84 = scmp.ne.s32.totalorder %s67, %s83
      %p85 = scmp.eq.s32.totalorder %s33, 0
      %p86 = por %p84, %p85
      %s88 = sadd.s32 %s87, 1
      %p91 = scmp.eq.s32.totalorder %s27, 1
      %p92 = scmp.ne.s32.totalorder %s87, %s89
      %p93 = scmp.eq.s32.totalorder %s27, 0
      %p94 = por %p92, %p93
      %p95 = scmp.ne.s32.totalorder %s87, %s89
      %p96 = scmp.eq.s32.totalorder %s32, 1
      %p97 = por %p95, %p96
      %p98 = scmp.ne.s32.totalorder %s89, %s90
      %p99 = scmp.eq.s32.totalorder %s32, 0
      %p100 = por %p98, %p99
      %p101 = scmp.ne.s32.totalorder %s89, %s90
      %p102 = scmp.eq.s32.totalorder %s33, 1
      %p103 = por %p101, %p102
      %p105 = scmp.ne.s32.totalorder %s90, %s104
      %p106 = scmp.eq.s32.totalorder %s33, 0
      %p107 = por %p105, %p106
      %s109 = sadd.s32 %s108, 1
      %p112 = scmp.eq.s32.totalorder %s27, 1
      %p113 = scmp.ne.s32.totalorder %s108, %s110
      %p114 = scmp.eq.s32.totalorder %s27, 0
      %p115 = por %p113, %p114
      %p116 = scmp.ne.s32.totalorder %s108, %s110
      %p117 = scmp.eq.s32.totalorder %s32, 1
      %p118 = por %p116, %p117
      %p119 = scmp.ne.s32.totalorder %s110, %s111
      %p120 = scmp.eq.s32.totalorder %s32, 0
      %p121 = por %p119, %p120
      %p122 = scmp.ne.s32.totalorder %s110, %s111
      %p123 = scmp.eq.s32.totalorder %s33, 1
      %p124 = por %p122, %p123
      %p126 = scmp.ne.s32.totalorder %s111, %s125
      %p127 = scmp.eq.s32.totalorder %s33, 0
      %p128 = por %p126, %p127
      %s130 = sadd.s32 %s129, 1
      %p133 = scmp.eq.s32.totalorder %s27, 1
      %p134 = scmp.ne.s32.totalorder %s129, %s131
      %p135 = scmp.eq.s32.totalorder %s27, 0
      %p136 = por %p134, %p135
      %p137 = scmp.ne.s32.totalorder %s129, %s131
      %p138 = scmp.eq.s32.totalorder %s32, 1
      %p139 = por %p137, %p138
      %p140 = scmp.ne.s32.totalorder %s131, %s132
      %p141 = scmp.eq.s32.totalorder %s32, 0
      %p142 = por %p140, %p141
      %p143 = scmp.ne.s32.totalorder %s131, %s132
      %p144 = scmp.eq.s32.totalorder %s33, 1
      %p145 = por %p143, %p144
      %p147 = scmp.ne.s32.totalorder %s132, %s146
      %p148 = scmp.eq.s32.totalorder %s33, 0
      %p149 = por %p147, %p148
      %s151 = sadd.s32 %s150, 1
      %p154 = scmp.eq.s32.totalorder %s27, 1
      %p155 = scmp.ne.s32.totalorder %s150, %s152
      %p156 = scmp.eq.s32.totalorder %s27, 0
      %p157 = por %p155, %p156
      %p158 = scmp.ne.s32.totalorder %s150, %s152
      %p159 = scmp.eq.s32.totalorder %s32, 1
      %p160 = por %p158, %p159
      %p161 = scmp.ne.s32.totalorder %s152, %s153
      %p162 = scmp.eq.s32.totalorder %s32, 0
      %p163 = por %p161, %p162
      %p164 = scmp.ne.s32.totalorder %s152, %s153
      %p165 = scmp.eq.s32.totalorder %s33, 1
      %p166 = por %p164, %p165
      %p168 = scmp.ne.s32.totalorder %s153, %s167
      %p169 = scmp.eq.s32.totalorder %s33, 0
      %p170 = por %p168, %p169
      %s172 = sadd.s32 %s171, 1
      %p175 = scmp.eq.s32.totalorder %s27, 1
      %p176 = scmp.ne.s32.totalorder %s171, %s173
      %p177 = scmp.eq.s32.totalorder %s27, 0
      %p178 = por %p176, %p177
      %p179 = scmp.ne.s32.totalorder %s171, %s173
      %p180 = scmp.eq.s32.totalorder %s32, 1
      %p181 = por %p179, %p180
      %p182 = scmp.ne.s32.totalorder %s173, %s174
      %p183 = scmp.eq.s32.totalorder %s32, 0
      %p184 = por %p182, %p183
      %p185 = scmp.ne.s32.totalorder %s173, %s174
      %p186 = scmp.eq.s32.totalorder %s33, 1
      %p187 = por %p185, %p186
      %p189 = scmp.ne.s32.totalorder %s174, %s188
      %p190 = scmp.eq.s32.totalorder %s33, 0
      %p191 = por %p189, %p190
      %s193 = sadd.s32 %s192, 1
      %p196 = scmp.eq.s32.totalorder %s27, 1
      %p197 = scmp.ne.s32.totalorder %s192, %s194
      %p198 = scmp.eq.s32.totalorder %s27, 0
      %p199 = por %p197, %p198
      %p200 = scmp.ne.s32.totalorder %s192, %s194
      %p201 = scmp.eq.s32.totalorder %s32, 1
      %p202 = por %p200, %p201
      %p203 = scmp.ne.s32.totalorder %s194, %s195
      %p204 = scmp.eq.s32.totalorder %s32, 0
      %p205 = por %p203, %p204
      %p206 = scmp.ne.s32.totalorder %s194, %s195
      %p207 = scmp.eq.s32.totalorder %s33, 1
      %p208 = por %p206, %p207
      %p210 = scmp.ne.s32.totalorder %s195, %s209
      %p211 = scmp.eq.s32.totalorder %s33, 0
      %p212 = por %p210, %p211
      %s214 = sadd.s32 %s213, 1
      %p217 = scmp.eq.s32.totalorder %s27, 1
      %p218 = scmp.ne.s32.totalorder %s213, %s215
      %p219 = scmp.eq.s32.totalorder %s27, 0
      %p220 = por %p218, %p219
      %p221 = scmp.ne.s32.totalorder %s213, %s215
      %p222 = scmp.eq.s32.totalorder %s32, 1
      %p223 = por %p221, %p222
      %p224 = scmp.ne.s32.totalorder %s215, %s216
      %p225 = scmp.eq.s32.totalorder %s32, 0
      %p226 = por %p224, %p225
      %p227 = scmp.ne.s32.totalorder %s215, %s216
      %p228 = scmp.eq.s32.totalorder %s33, 1
      %p229 = por %p227, %p228
      %p231 = scmp.ne.s32.totalorder %s216, %s230
      %p232 = scmp.eq.s32.totalorder %s33, 0
      %p233 = por %p231, %p232
      %s235 = sadd.s32 %s234, 1
      %p238 = scmp.eq.s32.totalorder %s27, 1
      %p239 = scmp.ne.s32.totalorder %s234, %s236
      %p240 = scmp.eq.s32.totalorder %s27, 0
      %p241 = por %p239, %p240
      %p242 = scmp.ne.s32.totalorder %s234, %s236
      %p243 = scmp.eq.s32.totalorder %s32, 1
      %p244 = por %p242, %p243
      %p245 = scmp.ne.s32.totalorder %s236, %s237
      %p246 = scmp.eq.s32.totalorder %s32, 0
      %p247 = por %p245, %p246
      %p248 = scmp.ne.s32.totalorder %s236, %s237
      %p249 = scmp.eq.s32.totalorder %s33, 1
      %p250 = por %p248, %p249
      %p252 = scmp.ne.s32.totalorder %s237, %s251
      %p253 = scmp.eq.s32.totalorder %s33, 0
      %p254 = por %p252, %p253
      %s255 = ssub.s32 %s27, %s34
      %p256 = scmp.eq.s32.totalorder %s255, 0
      %s258 = sadd.s32 %s257, 1
      %s259 = scalar_select %p256, %s257, %s258
      %p262 = pneg %p256
      %p263 = scmp.eq.s32.totalorder %s27, 1
      %p264 = por %p262, %p263
      %p265 = scmp.ne.s32.totalorder %s257, %s260
      %p266 = scmp.eq.s32.totalorder %s27, 0
      %p267 = por %p265, %p266
      %p268 = scmp.ne.s32.totalorder %s257, %s260
      %p269 = scmp.eq.s32.totalorder %s32, 1
      %p270 = por %p268, %p269
      %p271 = scmp.ne.s32.totalorder %s260, %s261
      %p272 = scmp.eq.s32.totalorder %s32, 0
      %p273 = por %p271, %p272
      %p274 = scmp.ne.s32.totalorder %s260, %s261
      %p275 = scmp.eq.s32.totalorder %s33, 1
      %p276 = por %p274, %p275
      %p278 = scmp.ne.s32.totalorder %s261, %s277
      %p279 = scmp.eq.s32.totalorder %s33, 0
      %p280 = por %p278, %p279
      %p281 = scmp.le.s32.totalorder 1, %s27
      %p282 = scmp.lt.s32.totalorder %s27, 3
      %p283 = pnand %p281, %p282
      %p284 = pneg %p283
      // Predicated region
      $region9: #{tpu_custom_call.1} parent=5 // pred_check
        _
      $region10: #{tpu_custom_call.1} parent=5 // pred_check_branch
        %286 = sbr.rel (%p283) target = $region12
      $region11: #{tpu_custom_call.1} parent=5 // pred_region
        %s287 = ssub.s32 %s27, 1
        // Predicated region
        $region13: #{tpu_custom_call.1} parent=11 // pred_check
          %p288 = pneg %p100
        $region14: #{tpu_custom_call.1} parent=11 // pred_check_branch
          %290 = sbr.rel (%p288) target = $region16
        $region15: #{tpu_custom_call.1} parent=11 // pred_region
          %s292 = ssub.s32 128, 128
          %293 = vsyncadd [#allocation7], %s292
          %s295 = sshll.u32 [#allocation8], 4
          %s296 = int_to_ptr.vmem [resolvable:$true] %s295
          %298 = dma.hbm_to_vmem [thread:$0]  %s2, 128, %s296, [#allocation7]
        $region16: #{tpu_custom_call.1} parent=11 // pred_fallthru
          _
        // Predicated region
        $region17: #{tpu_custom_call.1} parent=11 // pred_check
          %p299 = pneg %p121
        $region18: #{tpu_custom_call.1} parent=11 // pred_check_branch
          %301 = sbr.rel (%p299) target = $region20
        $region19: #{tpu_custom_call.1} parent=11 // pred_region
          %s303 = ssub.s32 1024, 1024
          %304 = vsyncadd [#allocation10], %s303
          %s305 = sshll.u32 [#allocation9], 4
          %s306 = int_to_ptr.vmem [resolvable:$true] %s305
          %311 = dma.hbm_to_vmem [thread:$0]  %s3, 1024, %s306, [#allocation10], 64, 64, 4
        $region20: #{tpu_custom_call.1} parent=11 // pred_fallthru
          _
        // Predicated region
        $region21: #{tpu_custom_call.1} parent=11 // pred_check
          %p312 = pneg %p142
        $region22: #{tpu_custom_call.1} parent=11 // pred_check_branch
          %314 = sbr.rel (%p312) target = $region24
        $region23: #{tpu_custom_call.1} parent=11 // pred_region
          %s316 = ssub.s32 2048, 2048
          %317 = vsyncadd [#allocation10], %s316
          %s318 = sshll.u32 [#allocation11], 4
          %s319 = int_to_ptr.vmem [resolvable:$true] %s318
          %324 = dma.hbm_to_vmem [thread:$0]  %s4, 2048, %s319, [#allocation10], 128, 128, 8
        $region24: #{tpu_custom_call.1} parent=11 // pred_fallthru
          _
        // Predicated region
        $region25: #{tpu_custom_call.1} parent=11 // pred_check
          %p325 = pneg %p163
        $region26: #{tpu_custom_call.1} parent=11 // pred_check_branch
          %327 = sbr.rel (%p325) target = $region28
        $region27: #{tpu_custom_call.1} parent=11 // pred_region
          _
        $region28: #{tpu_custom_call.1} parent=11 // pred_fallthru
          _
        // Predicated region
        $region29: #{tpu_custom_call.1} parent=11 // pred_check
          %p328 = pneg %p184
        $region30: #{tpu_custom_call.1} parent=11 // pred_check_branch
          %330 = sbr.rel (%p328) target = $region32
        $region31: #{tpu_custom_call.1} parent=11 // pred_region
          %s332 = ssub.s32 1024, 1024
          %333 = vsyncadd [#allocation13], %s332
          %s334 = sshll.u32 [#allocation12], 4
          %s335 = int_to_ptr.vmem [resolvable:$true] %s334
          %340 = dma.hbm_to_vmem [thread:$0]  %s6, 1024, %s335, [#allocation13], 64, 64, 4
        $region32: #{tpu_custom_call.1} parent=11 // pred_fallthru
          _
        // Predicated region
        $region33: #{tpu_custom_call.1} parent=11 // pred_check
          %p341 = pneg %p205
        $region34: #{tpu_custom_call.1} parent=11 // pred_check_branch
          %343 = sbr.rel (%p341) target = $region36
        $region35: #{tpu_custom_call.1} parent=11 // pred_region
          _
        $region36: #{tpu_custom_call.1} parent=11 // pred_fallthru
          _
        // Predicated region
        $region37: #{tpu_custom_call.1} parent=11 // pred_check
          %p344 = pneg %p226
        $region38: #{tpu_custom_call.1} parent=11 // pred_check_branch
          %346 = sbr.rel (%p344) target = $region40
        $region39: #{tpu_custom_call.1} parent=11 // pred_region
          %s348 = ssub.s32 1024, 1024
          %349 = vsyncadd [#allocation13], %s348
          %s350 = sshll.u32 [#allocation14], 4
          %s351 = int_to_ptr.vmem [resolvable:$true] %s350
          %356 = dma.hbm_to_vmem [thread:$0]  %s8, 1024, %s351, [#allocation13], 64, 64, 4
        $region40: #{tpu_custom_call.1} parent=11 // pred_fallthru
          _
        // Predicated region
        $region41: #{tpu_custom_call.1} parent=11 // pred_check
          %p357 = pneg %p247
        $region42: #{tpu_custom_call.1} parent=11 // pred_check_branch
          %359 = sbr.rel (%p357) target = $region44
        $region43: #{tpu_custom_call.1} parent=11 // pred_region
          _
        $region44: #{tpu_custom_call.1} parent=11 // pred_fallthru
          _
      $region12: #{tpu_custom_call.1} parent=5 // pred_fallthru
        _
      %p360 = scmp.lt.s32.totalorder %s27, 2
      // Predicated region
      $region45: #{tpu_custom_call.1} parent=5 // pred_check
        %p361 = pneg %p360
      $region46: #{tpu_custom_call.1} parent=5 // pred_check_branch
        %363 = sbr.rel (%p361) target = $region48
      $region47: #{tpu_custom_call.1} parent=5 // pred_region
        // Predicated region
        $region49: #{tpu_custom_call.1} parent=47 // pred_check
          %p364 = pneg %p47
        $region50: #{tpu_custom_call.1} parent=47 // pred_check_branch
          %366 = sbr.rel (%p364) target = $region52
        $region51: #{tpu_custom_call.1} parent=47 // pred_region
          %s367 = sand.u32 %s37, 1
          %s368 = scalar_lea.sflag [#allocation4], %s367
          %s369 = sand.u32 %s37, 1
          %s370 = smul.addr %s369, 4
          %s371 = scalar_lea.vmem [#allocation3], %s370
          %s373 = ssub.s32 64, 64
          %374 = vsyncadd %s368, %s373
          %s375 = smul.addr %s27, 64
          %s376 = scalar_lea.hbm %s0, %s375
          %s378 = sshll.u32 %s371, 4
          %s379 = int_to_ptr.vmem [resolvable:$true] %s378
          %381 = dma.hbm_to_vmem [thread:$0]  %s376, 64, %s379, %s368
        $region52: #{tpu_custom_call.1} parent=47 // pred_fallthru
          _
        // Predicated region
        $region53: #{tpu_custom_call.1} parent=47 // pred_check
          %p382 = pneg %p73
        $region54: #{tpu_custom_call.1} parent=47 // pred_check_branch
          %384 = sbr.rel (%p382) target = $region56
        $region55: #{tpu_custom_call.1} parent=47 // pred_region
          %s385 = sand.u32 %s27, 1
          %s386 = scalar_lea.sflag [#allocation7], %s385
          %s387 = sand.u32 %s63, 1
          %s388 = smul.addr %s387, 8
          %s389 = scalar_lea.vmem [#allocation6], %s388
          %s391 = ssub.s32 128, 128
          %392 = vsyncadd %s386, %s391
          %s393 = smul.addr %s27, 2
          %s394 = smul.addr %s393, 64
          %s395 = scalar_lea.hbm %s1, %s394
          %s396 = sshll.u32 %s389, 4
          %s397 = int_to_ptr.vmem [resolvable:$true] %s396
          %402 = dma.hbm_to_vmem [thread:$0]  %s395, 128, %s397, %s386, 64, 64, 4
        $region56: #{tpu_custom_call.1} parent=47 // pred_fallthru
          _
      $region48: #{tpu_custom_call.1} parent=5 // pred_fallthru
        _
      %p403 = scmp.le.s32.totalorder 1, %s27
      %p404 = scmp.lt.s32.totalorder %s27, 3
      %p405 = pnand %p403, %p404
      %p406 = pneg %p405
      // Predicated region
      $region57: #{tpu_custom_call.1} parent=5 // pred_check
        _
      $region58: #{tpu_custom_call.1} parent=5 // pred_check_branch
        %408 = sbr.rel (%p405) target = $region60
      $region59: #{tpu_custom_call.1} parent=5 // pred_region
        %s409 = ssub.s32 %s27, 1
        %s410 = sand.u32 %s40, 1
        %s411 = scalar_lea.sflag [#allocation4], %s410
        %s412 = sand.u32 %s40, 1
        %s413 = smul.addr %s412, 4
        %s414 = scalar_lea.vmem [#allocation3], %s413
        // Predicated region
        $region61: #{tpu_custom_call.1} parent=59 // pred_check
          %p415 = pneg %p53
        $region62: #{tpu_custom_call.1} parent=59 // pred_check_branch
          %417 = sbr.rel (%p415) target = $region64
        $region63: #{tpu_custom_call.1} parent=59 // pred_region
          %418 = dma.done %s411, 64
        $region64: #{tpu_custom_call.1} parent=59 // pred_fallthru
          _
        %s419 = sand.u32 %s32, 1
        %s420 = scalar_lea.sflag [#allocation7], %s419
        %s421 = sand.u32 %s66, 1
        %s422 = smul.addr %s421, 8
        %s423 = scalar_lea.vmem [#allocation6], %s422
        // Predicated region
        $region65: #{tpu_custom_call.1} parent=59 // pred_check
          %p424 = pneg %p79
        $region66: #{tpu_custom_call.1} parent=59 // pred_check_branch
          %426 = sbr.rel (%p424) target = $region68
        $region67: #{tpu_custom_call.1} parent=59 // pred_region
          %427 = dma.done %s420, 128
        $region68: #{tpu_custom_call.1} parent=59 // pred_fallthru
          _
        // Predicated region
        $region69: #{tpu_custom_call.1} parent=59 // pred_check
          %p428 = pneg %p100
        $region70: #{tpu_custom_call.1} parent=59 // pred_check_branch
          %430 = sbr.rel (%p428) target = $region72
        $region71: #{tpu_custom_call.1} parent=59 // pred_region
          %431 = dma.done [#allocation7], 128
        $region72: #{tpu_custom_call.1} parent=59 // pred_fallthru
          _
        // Predicated region
        $region73: #{tpu_custom_call.1} parent=59 // pred_check
          %p432 = pneg %p121
        $region74: #{tpu_custom_call.1} parent=59 // pred_check_branch
          %434 = sbr.rel (%p432) target = $region76
        $region75: #{tpu_custom_call.1} parent=59 // pred_region
          %435 = dma.done [#allocation10], 1024
        $region76: #{tpu_custom_call.1} parent=59 // pred_fallthru
          _
        // Predicated region
        $region77: #{tpu_custom_call.1} parent=59 // pred_check
          %p436 = pneg %p142
        $region78: #{tpu_custom_call.1} parent=59 // pred_check_branch
          %438 = sbr.rel (%p436) target = $region80
        $region79: #{tpu_custom_call.1} parent=59 // pred_region
          %439 = dma.done [#allocation10], 2048
        $region80: #{tpu_custom_call.1} parent=59 // pred_fallthru
          _
        // Predicated region
        $region81: #{tpu_custom_call.1} parent=59 // pred_check
          %p440 = pneg %p184
        $region82: #{tpu_custom_call.1} parent=59 // pred_check_branch
          %442 = sbr.rel (%p440) target = $region84
        $region83: #{tpu_custom_call.1} parent=59 // pred_region
          %443 = dma.done [#allocation13], 1024
        $region84: #{tpu_custom_call.1} parent=59 // pred_fallthru
          _
        // Predicated region
        $region85: #{tpu_custom_call.1} parent=59 // pred_check
          %p444 = pneg %p226
        $region86: #{tpu_custom_call.1} parent=59 // pred_check_branch
          %446 = sbr.rel (%p444) target = $region88
        $region87: #{tpu_custom_call.1} parent=59 // pred_region
          %447 = dma.done [#allocation13], 1024
        $region88: #{tpu_custom_call.1} parent=59 // pred_fallthru
          _
        %s448 = sand.u32 %s40, 1
        %s449 = scalar_lea.sflag [#allocation4], %s448
        %s450 = sand.u32 %s40, 1
        %s451 = smul.addr %s450, 4
        %s452 = scalar_lea.vmem [#allocation3], %s451
        %p453 = pneg %p53
        %p454 = pneg %p50
        %s455 = sand.u32 %s32, 1
        %s456 = scalar_lea.sflag [#allocation7], %s455
        %s457 = sand.u32 %s66, 1
        %s458 = smul.addr %s457, 8
        %s459 = scalar_lea.vmem [#allocation6], %s458
        %p460 = pneg %p79
        %p461 = pneg %p76
        %p462 = pneg %p100
        %p463 = pneg %p97
        %p464 = pneg %p121
        %p465 = pneg %p118
        %p466 = pneg %p142
        %p467 = pneg %p139
        %p468 = pneg %p163
        %p469 = pneg %p160
        %p470 = pneg %p184
        %p471 = pneg %p181
        %p472 = pneg %p205
        %p473 = pneg %p202
        %p474 = pneg %p226
        %p475 = pneg %p223
        %p476 = pneg %p247
        %p477 = pneg %p244
        %p478 = pneg %p273
        %p479 = pneg %p270
        %s480 = sand.u32 %s260, 1
        %s481 = scalar_lea.sflag [#allocation5], %s480
        %s482 = sand.u32 %s260, 1
        %s483 = smul.addr %s482, 8
        %s484 = scalar_lea.vmem [#allocation15], %s483
        %v486 = vld [vmem:[%s414] sm:$0xf]
        %v487 = vunpack.c.l.bf16 %v486
        %v488 = vld [vmem:[%s423] sm:$0xf]
        %v489 = vld [vmem:[%s423 + $0x4] sm:$0xf]
        %v490 = vunpack.c.l.bf16 %v488
        %v491 = vunpack.c.l.bf16 %v489
        %v492 = vld [vmem:[#allocation8] sm:$0x1]
        %v493 = vld [vmem:[#allocation8 + $0x1] sm:$0x1]
        %v494 = vld [vmem:[#allocation8 + $0x2] sm:$0x1]
        %v495 = vld [vmem:[#allocation8 + $0x3] sm:$0x1]
        %v496 = vld [vmem:[#allocation8 + $0x4] sm:$0x1]
        %v497 = vld [vmem:[#allocation8 + $0x5] sm:$0x1]
        %498 = vadd.xlane.f32.xlu0 %v487
        %v499 = vpop.xlane.xlu0 %498
        %v500 = vmul.f32 %v499, 0.03125
        %v501 = vmul.f32 %v487, %v487
        %502 = vadd.xlane.f32.xlu0 %v501
        %v503 = vpop.xlane.xlu0 %502
        %v504 = vmul.f32 %v503, 0.03125
        %v505 = vmul.f32 %v500, %v500
        %v506 = vsub.f32 %v504, %v505
        %v507 = vmax.f32 %v506, 0.0
        %v508 = vsub.f32 %v487, %v500
        %v509 = vadd.f32 %v507, 1e-05
        %v510 = vrsqrt.pop %v509
        %v511 = vmul.f32 %v508, %v510
        %v512 = vlaneseq
        %v513 = vshrl.u32 %v512, 7
        %v514 = vsub.s32 0, %v513
        %v515 = vrot.slane %v492, %v514
        %v516 = vmul.f32 %v511, %v515
        %v517 = vlaneseq
        %v518 = vshrl.u32 %v517, 7
        %v519 = vsub.s32 0, %v518
        %v520 = vrot.slane %v493, %v519
        %v521 = vadd.f32 %v516, %v520
        %522 = vadd.xlane.f32.xlu0 %v490
        %v523 = vpop.xlane.xlu0 %522
        %524 = vadd.xlane.f32.xlu0 %v491
        %v525 = vpop.xlane.xlu0 %524
        %v526 = vmul.f32 %v523, 0.03125
        %v527 = vmul.f32 %v525, 0.03125
        %v528 = vmul.f32 %v490, %v490
        %v529 = vmul.f32 %v491, %v491
        %530 = vadd.xlane.f32.xlu0 %v528
        %v531 = vpop.xlane.xlu0 %530
        %532 = vadd.xlane.f32.xlu0 %v529
        %v533 = vpop.xlane.xlu0 %532
        %v534 = vmul.f32 %v531, 0.03125
        %v535 = vmul.f32 %v533, 0.03125
        %v536 = vmul.f32 %v526, %v526
        %v537 = vmul.f32 %v527, %v527
        %v538 = vsub.f32 %v534, %v536
        %v539 = vsub.f32 %v535, %v537
        %v540 = vmax.f32 %v538, 0.0
        %v541 = vmax.f32 %v539, 0.0
        %v542 = vsub.f32 %v490, %v526
        %v543 = vsub.f32 %v491, %v527
        %v544 = vadd.f32 %v540, 1e-05
        %v545 = vadd.f32 %v541, 1e-05
        %v546 = vrsqrt.pop %v544
        %v547 = vrsqrt.pop %v545
        %v548 = vmul.f32 %v542, %v546
        %v549 = vmul.f32 %v543, %v547
        %v550 = vlaneseq
        %v551 = vshrl.u32 %v550, 7
        %v552 = vsub.s32 0, %v551
        %v553 = vrot.slane %v494, %v552
        %v554 = vmul.f32 %v548, %v553
        %v555 = vmul.f32 %v549, %v553
        %v556 = vlaneseq
        %v557 = vshrl.u32 %v556, 7
        %v558 = vsub.s32 0, %v557
        %v559 = vrot.slane %v495, %v558
        %v560 = vadd.f32 %v554, %v559
        %v561 = vadd.f32 %v555, %v559
        %v562 = vpack.c.bf16 %v521, %v521
        %v563 = vld [vmem:[#allocation9] sm:$0xf]
        %v564 = vld [vmem:[#allocation9 + $0x4] sm:$0xf]
        %v565 = vld [vmem:[#allocation9 + $0x8] sm:$0xf]
        %v566 = vld [vmem:[#allocation9 + $0xc] sm:$0xf]
        %v567 = vld [vmem:[#allocation9 + $0x10] sm:$0xf]
        %v568 = vld [vmem:[#allocation9 + $0x14] sm:$0xf]
        %v569 = vld [vmem:[#allocation9 + $0x18] sm:$0xf]
        %v570 = vld [vmem:[#allocation9 + $0x1c] sm:$0xf]
        %v571 = vld [vmem:[#allocation9 + $0x20] sm:$0xf]
        %v572 = vld [vmem:[#allocation9 + $0x24] sm:$0xf]
        %v573 = vld [vmem:[#allocation9 + $0x28] sm:$0xf]
        %v574 = vld [vmem:[#allocation9 + $0x2c] sm:$0xf]
        %v575 = vld [vmem:[#allocation9 + $0x30] sm:$0xf]
        %v576 = vld [vmem:[#allocation9 + $0x34] sm:$0xf]
        %v577 = vld [vmem:[#allocation9 + $0x38] sm:$0xf]
        %v578 = vld [vmem:[#allocation9 + $0x3c] sm:$0xf]
        %v595 = vunpack.c.l.b16 %v563
        %v596 = vunpack.c.l.b16 %v564
        %v597 = vunpack.c.l.b16 %v565
        %v598 = vunpack.c.l.b16 %v566
        %v599 = vunpack.c.l.b16 %v567
        %v600 = vunpack.c.l.b16 %v568
        %v601 = vunpack.c.l.b16 %v569
        %v602 = vunpack.c.l.b16 %v570
        %v603 = vunpack.c.l.b16 %v571
        %v604 = vunpack.c.l.b16 %v572
        %v605 = vunpack.c.l.b16 %v573
        %v606 = vunpack.c.l.b16 %v574
        %v607 = vunpack.c.l.b16 %v575
        %v608 = vunpack.c.l.b16 %v576
        %v609 = vunpack.c.l.b16 %v577
        %v610 = vunpack.c.l.b16 %v578
        %v611 = vpack.c.b16 %v596, %v595
        %v612 = vpack.c.b16 %v598, %v597
        %v613 = vpack.c.b16 %v600, %v599
        %v614 = vpack.c.b16 %v602, %v601
        %v615 = vpack.c.b16 %v604, %v603
        %v616 = vpack.c.b16 %v606, %v605
        %v617 = vpack.c.b16 %v608, %v607
        %v618 = vpack.c.b16 %v610, %v609
        %627 = vmatprep.subr.bf16.mxu0 0
        %628 = vmatpush1.bf16.msra.mxu0 %v611
        %629 = vmatprep.subr.bf16.mxu0 0
        %630 = vmatpush1.bf16.msra.mxu0 %v612
        %631 = vmatprep.subr.bf16.mxu0 0
        %632 = vmatpush1.bf16.msra.mxu0 %v613
        %633 = vmatprep.subr.bf16.mxu0 0
        %634 = vmatpush1.bf16.msra.mxu0 %v614
        %635 = vmatprep.subr.bf16.mxu0 0
        %636 = vmatpush1.bf16.msra.mxu0 %v615
        %637 = vmatprep.subr.bf16.mxu0 0
        %638 = vmatpush1.bf16.msra.mxu0 %v616
        %639 = vmatprep.subr.bf16.mxu0 0
        %640 = vmatpush1.bf16.msra.mxu0 %v617
        %641 = vmatprep.subr.bf16.mxu0 0
        %642 = vmatpush1.bf16.msra.mxu0 %v618
        %643 = vmatprep.subr.bf16.mxu0 0
        %644 = vmatpush1.bf16.msra.mxu0 0
        %645 = vmatprep.subr.bf16.mxu0 0
        %646 = vmatpush1.bf16.msra.mxu0 0
        %647 = vmatprep.subr.bf16.mxu0 0
        %648 = vmatpush1.bf16.msra.mxu0 0
        %649 = vmatprep.subr.bf16.mxu0 0
        %650 = vmatpush1.bf16.msra.mxu0 0
        %651 = vmatprep.subr.bf16.mxu0 0
        %652 = vmatpush1.bf16.msra.mxu0 0
        %653 = vmatprep.subr.bf16.mxu0 0
        %654 = vmatpush1.bf16.msra.mxu0 0
        %655 = vmatprep.subr.bf16.mxu0 0
        %656 = vmatpush1.bf16.msra.mxu0 0
        %657 = vmatprep.subr.bf16.mxu0 0
        %658 = vmatpush1.bf16.msra.mxu0 0
        %659 = vmatprep.mubr.bf16.mxu0 0
        %660 = vmatmul.mubr.bf16.gmra.mrb[0].mxu0 %v562
        %v661 = vpop.f32.mrb[0].mxu0
        %v662 = vadd.f32 0.0, %v661
        %v663 = vpop.f32.mrb[0].mxu0
        %v664 = vpop.f32.mrb[0].mxu0
        %v665 = vpop.f32.mrb[0].mxu0
        %666 = vdwg.mxu0
        %v667 = vpack.c.bf16 %v561, %v560
        %v668 = vld [vmem:[#allocation11] sm:$0xff]
        %v669 = vld [vmem:[#allocation11 + $0x8] sm:$0xff]
        %v670 = vld [vmem:[#allocation11 + $0x10] sm:$0xff]
        %v671 = vld [vmem:[#allocation11 + $0x18] sm:$0xff]
        %v672 = vld [vmem:[#allocation11 + $0x20] sm:$0xff]
        %v673 = vld [vmem:[#allocation11 + $0x28] sm:$0xff]
        %v674 = vld [vmem:[#allocation11 + $0x30] sm:$0xff]
        %v675 = vld [vmem:[#allocation11 + $0x38] sm:$0xff]
        %v676 = vld [vmem:[#allocation11 + $0x40] sm:$0xff]
        %v677 = vld [vmem:[#allocation11 + $0x48] sm:$0xff]
        %v678 = vld [vmem:[#allocation11 + $0x50] sm:$0xff]
        %v679 = vld [vmem:[#allocation11 + $0x58] sm:$0xff]
        %v680 = vld [vmem:[#allocation11 + $0x60] sm:$0xff]
        %v681 = vld [vmem:[#allocation11 + $0x68] sm:$0xff]
        %v682 = vld [vmem:[#allocation11 + $0x70] sm:$0xff]
        %v683 = vld [vmem:[#allocation11 + $0x78] sm:$0xff]
        %v700 = vunpack.c.l.b16 %v668
        %v701 = vunpack.c.h.b16 %v668
        %v702 = vunpack.c.l.b16 %v669
        %v703 = vunpack.c.h.b16 %v669
        %v704 = vunpack.c.l.b16 %v670
        %v705 = vunpack.c.h.b16 %v670
        %v706 = vunpack.c.l.b16 %v671
        %v707 = vunpack.c.h.b16 %v671
        %v708 = vunpack.c.l.b16 %v672
        %v709 = vunpack.c.h.b16 %v672
        %v710 = vunpack.c.l.b16 %v673
        %v711 = vunpack.c.h.b16 %v673
        %v712 = vunpack.c.l.b16 %v674
        %v713 = vunpack.c.h.b16 %v674
        %v714 = vunpack.c.l.b16 %v675
        %v715 = vunpack.c.h.b16 %v675
        %v716 = vunpack.c.l.b16 %v676
        %v717 = vunpack.c.h.b16 %v676
        %v718 = vunpack.c.l.b16 %v677
        %v719 = vunpack.c.h.b16 %v677
        %v720 = vunpack.c.l.b16 %v678
        %v721 = vunpack.c.h.b16 %v678
        %v722 = vunpack.c.l.b16 %v679
        %v723 = vunpack.c.h.b16 %v679
        %v724 = vunpack.c.l.b16 %v680
        %v725 = vunpack.c.h.b16 %v680
        %v726 = vunpack.c.l.b16 %v681
        %v727 = vunpack.c.h.b16 %v681
        %v728 = vunpack.c.l.b16 %v682
        %v729 = vunpack.c.h.b16 %v682
        %v730 = vunpack.c.l.b16 %v683
        %v731 = vunpack.c.h.b16 %v683
        %v732 = vpack.c.b16 %v702, %v700
        %v733 = vpack.c.b16 %v703, %v701
        %v734 = vpack.c.b16 %v706, %v704
        %v735 = vpack.c.b16 %v707, %v705
        %v736 = vpack.c.b16 %v710, %v708
        %v737 = vpack.c.b16 %v711, %v709
        %v738 = vpack.c.b16 %v714, %v712
        %v739 = vpack.c.b16 %v715, %v713
        %v740 = vpack.c.b16 %v718, %v716
        %v741 = vpack.c.b16 %v719, %v717
        %v742 = vpack.c.b16 %v722, %v720
        %v743 = vpack.c.b16 %v723, %v721
        %v744 = vpack.c.b16 %v726, %v724
        %v745 = vpack.c.b16 %v727, %v725
        %v746 = vpack.c.b16 %v730, %v728
        %v747 = vpack.c.b16 %v731, %v729
        %764 = vmatprep.subr.bf16.mxu0 %v733
        %765 = vmatpush1.bf16.msra.mxu0 %v732
        %766 = vmatprep.subr.bf16.mxu0 %v735
        %767 = vmatpush1.bf16.msra.mxu0 %v734
        %768 = vmatprep.subr.bf16.mxu0 %v737
        %769 = vmatpush1.bf16.msra.mxu0 %v736
        %770 = vmatprep.subr.bf16.mxu0 %v739
        %771 = vmatpush1.bf16.msra.mxu0 %v738
        %772 = vmatprep.subr.bf16.mxu0 %v741
        %773 = vmatpush1.bf16.msra.mxu0 %v740
        %774 = vmatprep.subr.bf16.mxu0 %v743
        %775 = vmatpush1.bf16.msra.mxu0 %v742
        %776 = vmatprep.subr.bf16.mxu0 %v745
        %777 = vmatpush1.bf16.msra.mxu0 %v744
        %778 = vmatprep.subr.bf16.mxu0 %v747
        %779 = vmatpush1.bf16.msra.mxu0 %v746
        %780 = vmatprep.subr.bf16.mxu0 0
        %781 = vmatpush1.bf16.msra.mxu0 0
        %782 = vmatprep.subr.bf16.mxu0 0
        %783 = vmatpush1.bf16.msra.mxu0 0
        %784 = vmatprep.subr.bf16.mxu0 0
        %785 = vmatpush1.bf16.msra.mxu0 0
        %786 = vmatprep.subr.bf16.mxu0 0
        %787 = vmatpush1.bf16.msra.mxu0 0
        %788 = vmatprep.subr.bf16.mxu0 0
        %789 = vmatpush1.bf16.msra.mxu0 0
        %790 = vmatprep.subr.bf16.mxu0 0
        %791 = vmatpush1.bf16.msra.mxu0 0
        %792 = vmatprep.subr.bf16.mxu0 0
        %793 = vmatpush1.bf16.msra.mxu0 0
        %794 = vmatprep.subr.bf16.mxu0 0
        %795 = vmatpush1.bf16.msra.mxu0 0
        %796 = vmatprep.mubr.bf16.mxu0 0
        %797 = vmatmul.mubr.bf16.gmra.mrb[0].mxu0 %v667
        %v798 = vpop.f32.mrb[0].mxu0
        %v799 = vadd.f32 0.0, %v798
        %v800 = vpop.f32.mrb[0].mxu0
        %v801 = vadd.f32 0.0, %v800
        %v802 = vpop.f32.mrb[0].mxu0
        %v803 = vadd.f32 0.0, %v802
        %v804 = vpop.f32.mrb[0].mxu0
        %v805 = vadd.f32 0.0, %v804
        %806 = vdwg.mxu0
        %v807 = vpack.c.bf16 %v662, %v662
        %v808 = vpack.c.bf16 %v803, %v799
        %v809 = vpack.c.bf16 %v805, %v801
        %vm810 = vcmask 31744
        %v812 = vsel %vm810, %v807, 0
        %v815 = vsel %vm810, %v808, 0
        %817 = vmatprep.subr.bf16.mxu0 0
        %818 = vmatpush1.bf16.xpose.msra.mxu0 %v815
        %819 = vmatprep.subr.bf16.mxu0 0
        %820 = vmatpush1.bf16.xpose.msra.mxu0 0
        %821 = vmatprep.subr.bf16.mxu0 0
        %822 = vmatpush1.bf16.xpose.msra.mxu0 0
        %823 = vmatprep.subr.bf16.mxu0 0
        %824 = vmatpush1.bf16.xpose.msra.mxu0 0
        %825 = vmatprep.subr.bf16.mxu0 0
        %826 = vmatpush1.bf16.xpose.msra.mxu0 0
        %827 = vmatprep.subr.bf16.mxu0 0
        %828 = vmatpush1.bf16.xpose.msra.mxu0 0
        %829 = vmatprep.subr.bf16.mxu0 0
        %830 = vmatpush1.bf16.xpose.msra.mxu0 0
        %831 = vmatprep.subr.bf16.mxu0 0
        %832 = vmatpush1.bf16.xpose.msra.mxu0 0
        %833 = vmatprep.subr.bf16.mxu0 0
        %834 = vmatpush1.bf16.xpose.msra.mxu0 0
        %835 = vmatprep.subr.bf16.mxu0 0
        %836 = vmatpush1.bf16.xpose.msra.mxu0 0
        %837 = vmatprep.subr.bf16.mxu0 0
        %838 = vmatpush1.bf16.xpose.msra.mxu0 0
        %839 = vmatprep.subr.bf16.mxu0 0
        %840 = vmatpush1.bf16.xpose.msra.mxu0 0
        %841 = vmatprep.subr.bf16.mxu0 0
        %842 = vmatpush1.bf16.xpose.msra.mxu0 0
        %843 = vmatprep.subr.bf16.mxu0 0
        %844 = vmatpush1.bf16.xpose.msra.mxu0 0
        %845 = vmatprep.subr.bf16.mxu0 0
        %846 = vmatpush1.bf16.xpose.msra.mxu0 0
        %847 = vmatprep.subr.bf16.mxu0 0
        %848 = vmatpush1.bf16.xpose.msra.mxu0 0
        %849 = vmatprep.mubr.bf16.mxu0 0
        %850 = vmatmul.mubr.bf16.gmra.mrb[0].mxu0 %v812
        %v851 = vpop.f32.mrb[0].mxu0
        %v852 = vadd.f32 0.0, %v851
        %v853 = vpop.f32.mrb[0].mxu0
        %v854 = vpop.f32.mrb[0].mxu0
        %v855 = vpop.f32.mrb[0].mxu0
        %856 = vdwg.mxu0
        %vm857 = vcmask 130048
        %v858 = vsel %vm857, %v852, -inf
        %859 = vmax.xlane.f32.xlu0 %v858
        %v860 = vpop.xlane.xlu0 %859
        %v861 = vsub.f32 -inf, %v860
        %v862 = vmul.f32 %v861, 1.442695
        %v863 = vpow.pop %v862
        %v864 = vsub.f32 %v852, %v860
        %v865 = vmul.f32 %v864, 1.442695
        %v866 = vpow.pop %v865
        %v867 = vmul.f32 %v863, 0.0
        %v868 = vsel %vm857, %v866, 0.0
        %869 = vadd.xlane.f32.xlu0 %v868
        %v870 = vpop.xlane.xlu0 %869
        %v871 = vadd.f32 %v867, %v870
        %v872 = vpack.c.bf16 %v866, %v866
        %v874 = vsel %vm857, %v872, 0
        %876 = vmatprep.subr.bf16.mxu0 0
        %877 = vmatpush1.bf16.msra.mxu0 %v809
        %878 = vmatprep.subr.bf16.mxu0 0
        %879 = vmatpush1.bf16.msra.mxu0 0
        %880 = vmatprep.subr.bf16.mxu0 0
        %881 = vmatpush1.bf16.msra.mxu0 0
        %882 = vmatprep.subr.bf16.mxu0 0
        %883 = vmatpush1.bf16.msra.mxu0 0
        %884 = vmatprep.subr.bf16.mxu0 0
        %885 = vmatpush1.bf16.msra.mxu0 0
        %886 = vmatprep.subr.bf16.mxu0 0
        %887 = vmatpush1.bf16.msra.mxu0 0
        %888 = vmatprep.subr.bf16.mxu0 0
        %889 = vmatpush1.bf16.msra.mxu0 0
        %890 = vmatprep.subr.bf16.mxu0 0
        %891 = vmatpush1.bf16.msra.mxu0 0
        %892 = vmatprep.subr.bf16.mxu0 0
        %893 = vmatpush1.bf16.msra.mxu0 0
        %894 = vmatprep.subr.bf16.mxu0 0
        %895 = vmatpush1.bf16.msra.mxu0 0
        %896 = vmatprep.subr.bf16.mxu0 0
        %897 = vmatpush1.bf16.msra.mxu0 0
        %898 = vmatprep.subr.bf16.mxu0 0
        %899 = vmatpush1.bf16.msra.mxu0 0
        %900 = vmatprep.subr.bf16.mxu0 0
        %901 = vmatpush1.bf16.msra.mxu0 0
        %902 = vmatprep.subr.bf16.mxu0 0
        %903 = vmatpush1.bf16.msra.mxu0 0
        %904 = vmatprep.subr.bf16.mxu0 0
        %905 = vmatpush1.bf16.msra.mxu0 0
        %906 = vmatprep.subr.bf16.mxu0 0
        %907 = vmatpush1.bf16.msra.mxu0 0
        %908 = vmatprep.mubr.bf16.mxu0 0
        %909 = vmatmul.mubr.bf16.gmra.mrb[0].mxu0 %v874
        %v910 = vpop.f32.mrb[0].mxu0
        %v911 = vadd.f32 0.0, %v910
        %v912 = vpop.f32.mrb[0].mxu0
        %v913 = vpop.f32.mrb[0].mxu0
        %v914 = vpop.f32.mrb[0].mxu0
        %915 = vdwg.mxu0
        %v916 = vadd.f32 %v867, %v911
        %v917 = vrcp.pop %v871
        %v918 = vmul.f32 %v916, %v917
        %919 = vst.msk [vmem:[#allocation2] sm:$0xff] %vm810, %v918
        %921 = vrot.lane.b32.xlu0 %v807, 124
        %v922 = vpop.permute.xlu0 %921
        %924 = vrot.lane.b32.xlu0 %v808, 124
        %v925 = vpop.permute.xlu0 %924
        %v927 = vsel %vm810, %v922, 0
        %v930 = vsel %vm810, %v925, 0
        %932 = vmatprep.subr.bf16.mxu0 0
        %933 = vmatpush1.bf16.xpose.msra.mxu0 %v930
        %934 = vmatprep.subr.bf16.mxu0 0
        %935 = vmatpush1.bf16.xpose.msra.mxu0 0
        %936 = vmatprep.subr.bf16.mxu0 0
        %937 = vmatpush1.bf16.xpose.msra.mxu0 0
        %938 = vmatprep.subr.bf16.mxu0 0
        %939 = vmatpush1.bf16.xpose.msra.mxu0 0
        %940 = vmatprep.subr.bf16.mxu0 0
        %941 = vmatpush1.bf16.xpose.msra.mxu0 0
        %942 = vmatprep.subr.bf16.mxu0 0
        %943 = vmatpush1.bf16.xpose.msra.mxu0 0
        %944 = vmatprep.subr.bf16.mxu0 0
        %945 = vmatpush1.bf16.xpose.msra.mxu0 0
        %946 = vmatprep.subr.bf16.mxu0 0
        %947 = vmatpush1.bf16.xpose.msra.mxu0 0
        %948 = vmatprep.subr.bf16.mxu0 0
        %949 = vmatpush1.bf16.xpose.msra.mxu0 0
        %950 = vmatprep.subr.bf16.mxu0 0
        %951 = vmatpush1.bf16.xpose.msra.mxu0 0
        %952 = vmatprep.subr.bf16.mxu0 0
        %953 = vmatpush1.bf16.xpose.msra.mxu0 0
        %954 = vmatprep.subr.bf16.mxu0 0
        %955 = vmatpush1.bf16.xpose.msra.mxu0 0
        %956 = vmatprep.subr.bf16.mxu0 0
        %957 = vmatpush1.bf16.xpose.msra.mxu0 0
        %958 = vmatprep.subr.bf16.mxu0 0
        %959 = vmatpush1.bf16.xpose.msra.mxu0 0
        %960 = vmatprep.subr.bf16.mxu0 0
        %961 = vmatpush1.bf16.xpose.msra.mxu0 0
        %962 = vmatprep.subr.bf16.mxu0 0
        %963 = vmatpush1.bf16.xpose.msra.mxu0 0
        %964 = vmatprep.mubr.bf16.mxu0 0
        %965 = vmatmul.mubr.bf16.gmra.mrb[0].mxu0 %v927
        %v966 = vpop.f32.mrb[0].mxu0
        %v967 = vadd.f32 0.0, %v966
        %v968 = vpop.f32.mrb[0].mxu0
        %v969 = vpop.f32.mrb[0].mxu0
        %v970 = vpop.f32.mrb[0].mxu0
        %971 = vdwg.mxu0
        %v972 = vsel %vm857, %v967, -inf
        %973 = vmax.xlane.f32.xlu0 %v972
        %v974 = vpop.xlane.xlu0 %973
        %v975 = vsub.f32 -inf, %v974
        %v976 = vmul.f32 %v975, 1.442695
        %v977 = vpow.pop %v976
        %v978 = vsub.f32 %v967, %v974
        %v979 = vmul.f32 %v978, 1.442695
        %v980 = vpow.pop %v979
        %v981 = vmul.f32 %v977, 0.0
        %v982 = vsel %vm857, %v980, 0.0
        %983 = vadd.xlane.f32.xlu0 %v982
        %v984 = vpop.xlane.xlu0 %983
        %v985 = vadd.f32 %v981, %v984
        %v986 = vpack.c.bf16 %v980, %v980
        %988 = vrot.lane.b32.xlu0 %v809, 124
        %v989 = vpop.permute.xlu0 %988
        %v992 = vsel %vm857, %v986, 0
        %994 = vmatprep.subr.bf16.mxu0 0
        %995 = vmatpush1.bf16.msra.mxu0 %v989
        %996 = vmatprep.subr.bf16.mxu0 0
        %997 = vmatpush1.bf16.msra.mxu0 0
        %998 = vmatprep.subr.bf16.mxu0 0
        %999 = vmatpush1.bf16.msra.mxu0 0
        %1000 = vmatprep.subr.bf16.mxu0 0
        %1001 = vmatpush1.bf16.msra.mxu0 0
        %1002 = vmatprep.subr.bf16.mxu0 0
        %1003 = vmatpush1.bf16.msra.mxu0 0
        %1004 = vmatprep.subr.bf16.mxu0 0
        %1005 = vmatpush1.bf16.msra.mxu0 0
        %1006 = vmatprep.subr.bf16.mxu0 0
        %1007 = vmatpush1.bf16.msra.mxu0 0
        %1008 = vmatprep.subr.bf16.mxu0 0
        %1009 = vmatpush1.bf16.msra.mxu0 0
        %1010 = vmatprep.subr.bf16.mxu0 0
        %1011 = vmatpush1.bf16.msra.mxu0 0
        %1012 = vmatprep.subr.bf16.mxu0 0
        %1013 = vmatpush1.bf16.msra.mxu0 0
        %1014 = vmatprep.subr.bf16.mxu0 0
        %1015 = vmatpush1.bf16.msra.mxu0 0
        %1016 = vmatprep.subr.bf16.mxu0 0
        %1017 = vmatpush1.bf16.msra.mxu0 0
        %1018 = vmatprep.subr.bf16.mxu0 0
        %1019 = vmatpush1.bf16.msra.mxu0 0
        %1020 = vmatprep.subr.bf16.mxu0 0
        %1021 = vmatpush1.bf16.msra.mxu0 0
        %1022 = vmatprep.subr.bf16.mxu0 0
        %1023 = vmatpush1.bf16.msra.mxu0 0
        %1024 = vmatprep.subr.bf16.mxu0 0
        %1025 = vmatpush1.bf16.msra.mxu0 0
        %1026 = vmatprep.mubr.bf16.mxu0 0
        %1027 = vmatmul.mubr.bf16.gmra.mrb[0].mxu0 %v992
        %v1028 = vpop.f32.mrb[0].mxu0
        %v1029 = vadd.f32 0.0, %v1028
        %v1030 = vpop.f32.mrb[0].mxu0
        %v1031 = vpop.f32.mrb[0].mxu0
        %v1032 = vpop.f32.mrb[0].mxu0
        %1033 = vdwg.mxu0
        %v1034 = vadd.f32 %v981, %v1029
        %v1035 = vrcp.pop %v985
        %v1036 = vmul.f32 %v1034, %v1035
        %1038 = vrot.lane.b32.xlu0 %v1036, 4
        %v1039 = vpop.permute.xlu0 %1038
        %vm1041 = vcmask 64544
        %1042 = vst.msk [vmem:[#allocation2] sm:$0xff] %vm1041, %v1039
        %1043 = vrot.lane.b32.xlu0 %v807, 120
        %v1044 = vpop.permute.xlu0 %1043
        %1045 = vrot.lane.b32.xlu0 %v808, 120
        %v1046 = vpop.permute.xlu0 %1045
        %v1048 = vsel %vm810, %v1044, 0
        %v1051 = vsel %vm810, %v1046, 0
        %1053 = vmatprep.subr.bf16.mxu0 0
        %1054 = vmatpush1.bf16.xpose.msra.mxu0 %v1051
        %1055 = vmatprep.subr.bf16.mxu0 0
        %1056 = vmatpush1.bf16.xpose.msra.mxu0 0
        %1057 = vmatprep.subr.bf16.mxu0 0
        %1058 = vmatpush1.bf16.xpose.msra.mxu0 0
        %1059 = vmatprep.subr.bf16.mxu0 0
        %1060 = vmatpush1.bf16.xpose.msra.mxu0 0
        %1061 = vmatprep.subr.bf16.mxu0 0
        %1062 = vmatpush1.bf16.xpose.msra.mxu0 0
        %1063 = vmatprep.subr.bf16.mxu0 0
        %1064 = vmatpush1.bf16.xpose.msra.mxu0 0
        %1065 = vmatprep.subr.bf16.mxu0 0
        %1066 = vmatpush1.bf16.xpose.msra.mxu0 0
        %1067 = vmatprep.subr.bf16.mxu0 0
        %1068 = vmatpush1.bf16.xpose.msra.mxu0 0
        %1069 = vmatprep.subr.bf16.mxu0 0
        %1070 = vmatpush1.bf16.xpose.msra.mxu0 0
        %1071 = vmatprep.subr.bf16.mxu0 0
        %1072 = vmatpush1.bf16.xpose.msra.mxu0 0
        %1073 = vmatprep.subr.bf16.mxu0 0
        %1074 = vmatpush1.bf16.xpose.msra.mxu0 0
        %1075 = vmatprep.subr.bf16.mxu0 0
        %1076 = vmatpush1.bf16.xpose.msra.mxu0 0
        %1077 = vmatprep.subr.bf16.mxu0 0
        %1078 = vmatpush1.bf16.xpose.msra.mxu0 0
        %1079 = vmatprep.subr.bf16.mxu0 0
        %1080 = vmatpush1.bf16.xpose.msra.mxu0 0
        %1081 = vmatprep.subr.bf16.mxu0 0
        %1082 = vmatpush1.bf16.xpose.msra.mxu0 0
        %1083 = vmatprep.subr.bf16.mxu0 0
        %1084 = vmatpush1.bf16.xpose.msra.mxu0 0
        %1085 = vmatprep.mubr.bf16.mxu0 0
        %1086 = vmatmul.mubr.bf16.gmra.mrb[0].mxu0 %v1048
        %v1087 = vpop.f32.mrb[0].mxu0
        %v1088 = vadd.f32 0.0, %v1087
        %v1089 = vpop.f32.mrb[0].mxu0
        %v1090 = vpop.f32.mrb[0].mxu0
        %v1091 = vpop.f32.mrb[0].mxu0
        %1092 = vdwg.mxu0
        %v1093 = vsel %vm857, %v1088, -inf
        %1094 = vmax.xlane.f32.xlu0 %v1093
        %v1095 = vpop.xlane.xlu0 %1094
        %v1096 = vsub.f32 -inf, %v1095
        %v1097 = vmul.f32 %v1096, 1.442695
        %v1098 = vpow.pop %v1097
        %v1099 = vsub.f32 %v1088, %v1095
        %v1100 = vmul.f32 %v1099, 1.442695
        %v1101 = vpow.pop %v1100
        %v1102 = vmul.f32 %v1098, 0.0
        %v1103 = vsel %vm857, %v1101, 0.0
        %1104 = vadd.xlane.f32.xlu0 %v1103
        %v1105 = vpop.xlane.xlu0 %1104
        %v1106 = vadd.f32 %v1102, %v1105
        %v1107 = vpack.c.bf16 %v1101, %v1101
        %1108 = vrot.lane.b32.xlu0 %v809, 120
        %v1109 = vpop.permute.xlu0 %1108
        %v1112 = vsel %vm857, %v1107, 0
        %1114 = vmatprep.subr.bf16.mxu0 0
        %1115 = vmatpush1.bf16.msra.mxu0 %v1109
        %1116 = vmatprep.subr.bf16.mxu0 0
        %1117 = vmatpush1.bf16.msra.mxu0 0
        %1118 = vmatprep.subr.bf16.mxu0 0
        %1119 = vmatpush1.bf16.msra.mxu0 0
        %1120 = vmatprep.subr.bf16.mxu0 0
        %1121 = vmatpush1.bf16.msra.mxu0 0
        %1122 = vmatprep.subr.bf16.mxu0 0
        %1123 = vmatpush1.bf16.msra.mxu0 0
        %1124 = vmatprep.subr.bf16.mxu0 0
        %1125 = vmatpush1.bf16.msra.mxu0 0
        %1126 = vmatprep.subr.bf16.mxu0 0
        %1127 = vmatpush1.bf16.msra.mxu0 0
        %1128 = vmatprep.subr.bf16.mxu0 0
        %1129 = vmatpush1.bf16.msra.mxu0 0
        %1130 = vmatprep.subr.bf16.mxu0 0
        %1131 = vmatpush1.bf16.msra.mxu0 0
        %1132 = vmatprep.subr.bf16.mxu0 0
        %1133 = vmatpush1.bf16.msra.mxu0 0
        %1134 = vmatprep.subr.bf16.mxu0 0
        %1135 = vmatpush1.bf16.msra.mxu0 0
        %1136 = vmatprep.subr.bf16.mxu0 0
        %1137 = vmatpush1.bf16.msra.mxu0 0
        %1138 = vmatprep.subr.bf16.mxu0 0
        %1139 = vmatpush1.bf16.msra.mxu0 0
        %1140 = vmatprep.subr.bf16.mxu0 0
        %1141 = vmatpush1.bf16.msra.mxu0 0
        %1142 = vmatprep.subr.bf16.mxu0 0
        %1143 = vmatpush1.bf16.msra.mxu0 0
        %1144 = vmatprep.subr.bf16.mxu0 0
        %1145 = vmatpush1.bf16.msra.mxu0 0
        %1146 = vmatprep.mubr.bf16.mxu0 0
        %1147 = vmatmul.mubr.bf16.gmra.mrb[0].mxu0 %v1112
        %v1148 = vpop.f32.mrb[0].mxu0
        %v1149 = vadd.f32 0.0, %v1148
        %v1150 = vpop.f32.mrb[0].mxu0
        %v1151 = vpop.f32.mrb[0].mxu0
        %v1152 = vpop.f32.mrb[0].mxu0
        %1153 = vdwg.mxu0
        %v1154 = vadd.f32 %v1102, %v1149
        %v1155 = vrcp.pop %v1106
        %v1156 = vmul.f32 %v1154, %v1155
        %1158 = vrot.lane.b32.xlu0 %v1156, 8
        %v1159 = vpop.permute.xlu0 %1158
        %vm1161 = vcmask 97344
        %1162 = vst.msk [vmem:[#allocation2] sm:$0xff] %vm1161, %v1159
        %1163 = vrot.lane.b32.xlu0 %v807, 116
        %v1164 = vpop.permute.xlu0 %1163
        %1165 = vrot.lane.b32.xlu0 %v808, 116
        %v1166 = vpop.permute.xlu0 %1165
        %v1168 = vsel %vm810, %v1164, 0
        %v1171 = vsel %vm810, %v1166, 0
        %1173 = vmatprep.subr.bf16.mxu0 0
        %1174 = vmatpush1.bf16.xpose.msra.mxu0 %v1171
        %1175 = vmatprep.subr.bf16.mxu0 0
        %1176 = vmatpush1.bf16.xpose.msra.mxu0 0
        %1177 = vmatprep.subr.bf16.mxu0 0
        %1178 = vmatpush1.bf16.xpose.msra.mxu0 0
        %1179 = vmatprep.subr.bf16.mxu0 0
        %1180 = vmatpush1.bf16.xpose.msra.mxu0 0
        %1181 = vmatprep.subr.bf16.mxu0 0
        %1182 = vmatpush1.bf16.xpose.msra.mxu0 0
        %1183 = vmatprep.subr.bf16.mxu0 0
        %1184 = vmatpush1.bf16.xpose.msra.mxu0 0
        %1185 = vmatprep.subr.bf16.mxu0 0
        %1186 = vmatpush1.bf16.xpose.msra.mxu0 0
        %1187 = vmatprep.subr.bf16.mxu0 0
        %1188 = vmatpush1.bf16.xpose.msra.mxu0 0
        %1189 = vmatprep.subr.bf16.mxu0 0
        %1190 = vmatpush1.bf16.xpose.msra.mxu0 0
        %1191 = vmatprep.subr.bf16.mxu0 0
        %1192 = vmatpush1.bf16.xpose.msra.mxu0 0
        %1193 = vmatprep.subr.bf16.mxu0 0
        %1194 = vmatpush1.bf16.xpose.msra.mxu0 0
        %1195 = vmatprep.subr.bf16.mxu0 0
        %1196 = vmatpush1.bf16.xpose.msra.mxu0 0
        %1197 = vmatprep.subr.bf16.mxu0 0
        %1198 = vmatpush1.bf16.xpose.msra.mxu0 0
        %1199 = vmatprep.subr.bf16.mxu0 0
        %1200 = vmatpush1.bf16.xpose.msra.mxu0 0
        %1201 = vmatprep.subr.bf16.mxu0 0
        %1202 = vmatpush1.bf16.xpose.msra.mxu0 0
        %1203 = vmatprep.subr.bf16.mxu0 0
        %1204 = vmatpush1.bf16.xpose.msra.mxu0 0
        %1205 = vmatprep.mubr.bf16.mxu0 0
        %1206 = vmatmul.mubr.bf16.gmra.mrb[0].mxu0 %v1168
        %v1207 = vpop.f32.mrb[0].mxu0
        %v1208 = vadd.f32 0.0, %v1207
        %v1209 = vpop.f32.mrb[0].mxu0
        %v1210 = vpop.f32.mrb[0].mxu0
        %v1211 = vpop.f32.mrb[0].mxu0
        %1212 = vdwg.mxu0
        %v1213 = vsel %vm857, %v1208, -inf
        %1214 = vmax.xlane.f32.xlu0 %v1213
        %v1215 = vpop.xlane.xlu0 %1214
        %v1216 = vsub.f32 -inf, %v1215
        %v1217 = vmul.f32 %v1216, 1.442695
        %v1218 = vpow.pop %v1217
        %v1219 = vsub.f32 %v1208, %v1215
        %v1220 = vmul.f32 %v1219, 1.442695
        %v1221 = vpow.pop %v1220
        %v1222 = vmul.f32 %v1218, 0.0
        %v1223 = vsel %vm857, %v1221, 0.0
        %1224 = vadd.xlane.f32.xlu0 %v1223
        %v1225 = vpop.xlane.xlu0 %1224
        %v1226 = vadd.f32 %v1222, %v1225
        %v1227 = vpack.c.bf16 %v1221, %v1221
        %1228 = vrot.lane.b32.xlu0 %v809, 116
        %v1229 = vpop.permute.xlu0 %1228
        %v1232 = vsel %vm857, %v1227, 0
        %1234 = vmatprep.subr.bf16.mxu0 0
        %1235 = vmatpush1.bf16.msra.mxu0 %v1229
        %1236 = vmatprep.subr.bf16.mxu0 0
        %1237 = vmatpush1.bf16.msra.mxu0 0
        %1238 = vmatprep.subr.bf16.mxu0 0
        %1239 = vmatpush1.bf16.msra.mxu0 0
        %1240 = vmatprep.subr.bf16.mxu0 0
        %1241 = vmatpush1.bf16.msra.mxu0 0
        %1242 = vmatprep.subr.bf16.mxu0 0
        %1243 = vmatpush1.bf16.msra.mxu0 0
        %1244 = vmatprep.subr.bf16.mxu0 0
        %1245 = vmatpush1.bf16.msra.mxu0 0
        %1246 = vmatprep.subr.bf16.mxu0 0
        %1247 = vmatpush1.bf16.msra.mxu0 0
        %1248 = vmatprep.subr.bf16.mxu0 0
        %1249 = vmatpush1.bf16.msra.mxu0 0
        %1250 = vmatprep.subr.bf16.mxu0 0
        %1251 = vmatpush1.bf16.msra.mxu0 0
        %1252 = vmatprep.subr.bf16.mxu0 0
        %1253 = vmatpush1.bf16.msra.mxu0 0
        %1254 = vmatprep.subr.bf16.mxu0 0
        %1255 = vmatpush1.bf16.msra.mxu0 0
        %1256 = vmatprep.subr.bf16.mxu0 0
        %1257 = vmatpush1.bf16.msra.mxu0 0
        %1258 = vmatprep.subr.bf16.mxu0 0
        %1259 = vmatpush1.bf16.msra.mxu0 0
        %1260 = vmatprep.subr.bf16.mxu0 0
        %1261 = vmatpush1.bf16.msra.mxu0 0
        %1262 = vmatprep.subr.bf16.mxu0 0
        %1263 = vmatpush1.bf16.msra.mxu0 0
        %1264 = vmatprep.subr.bf16.mxu0 0
        %1265 = vmatpush1.bf16.msra.mxu0 0
        %1266 = vmatprep.mubr.bf16.mxu0 0
        %1267 = vmatmul.mubr.bf16.gmra.mrb[0].mxu0 %v1232
        %v1268 = vpop.f32.mrb[0].mxu0
        %v1269 = vadd.f32 0.0, %v1268
        %v1270 = vpop.f32.mrb[0].mxu0
        %v1271 = vpop.f32.mrb[0].mxu0
        %v1272 = vpop.f32.mrb[0].mxu0
        %1273 = vdwg.mxu0
        %v1274 = vadd.f32 %v1222, %v1269
        %v1275 = vrcp.pop %v1226
        %v1276 = vmul.f32 %v1274, %v1275
        %1278 = vrot.lane.b32.xlu0 %v1276, 12
        %v1279 = vpop.permute.xlu0 %1278
        %vm1281 = vcmask 130144
        %1282 = vst.msk [vmem:[#allocation2] sm:$0xff] %vm1281, %v1279
        %1283 = vrot.lane.b32.xlu0 %v807, 112
        %v1284 = vpop.permute.xlu0 %1283
        %1285 = vrot.lane.b32.xlu0 %v808, 112
        %v1286 = vpop.permute.xlu0 %1285
        %v1288 = vsel %vm810, %v1284, 0
        %v1291 = vsel %vm810, %v1286, 0
        %1293 = vmatprep.subr.bf16.mxu0 0
        %1294 = vmatpush1.bf16.xpose.msra.mxu0 %v1291
        %1295 = vmatprep.subr.bf16.mxu0 0
        %1296 = vmatpush1.bf16.xpose.msra.mxu0 0
        %1297 = vmatprep.subr.bf16.mxu0 0
        %1298 = vmatpush1.bf16.xpose.msra.mxu0 0
        %1299 = vmatprep.subr.bf16.mxu0 0
        %1300 = vmatpush1.bf16.xpose.msra.mxu0 0
        %1301 = vmatprep.subr.bf16.mxu0 0
        %1302 = vmatpush1.bf16.xpose.msra.mxu0 0
        %1303 = vmatprep.subr.bf16.mxu0 0
        %1304 = vmatpush1.bf16.xpose.msra.mxu0 0
        %1305 = vmatprep.subr.bf16.mxu0 0
        %1306 = vmatpush1.bf16.xpose.msra.mxu0 0
        %1307 = vmatprep.subr.bf16.mxu0 0
        %1308 = vmatpush1.bf16.xpose.msra.mxu0 0
        %1309 = vmatprep.subr.bf16.mxu0 0
        %1310 = vmatpush1.bf16.xpose.msra.mxu0 0
        %1311 = vmatprep.subr.bf16.mxu0 0
        %1312 = vmatpush1.bf16.xpose.msra.mxu0 0
        %1313 = vmatprep.subr.bf16.mxu0 0
        %1314 = vmatpush1.bf16.xpose.msra.mxu0 0
        %1315 = vmatprep.subr.bf16.mxu0 0
        %1316 = vmatpush1.bf16.xpose.msra.mxu0 0
        %1317 = vmatprep.subr.bf16.mxu0 0
        %1318 = vmatpush1.bf16.xpose.msra.mxu0 0
        %1319 = vmatprep.subr.bf16.mxu0 0
        %1320 = vmatpush1.bf16.xpose.msra.mxu0 0
        %1321 = vmatprep.subr.bf16.mxu0 0
        %1322 = vmatpush1.bf16.xpose.msra.mxu0 0
        %1323 = vmatprep.subr.bf16.mxu0 0
        %1324 = vmatpush1.bf16.xpose.msra.mxu0 0
        %1325 = vmatprep.mubr.bf16.mxu0 0
        %1326 = vmatmul.mubr.bf16.gmra.mrb[0].mxu0 %v1288
        %v1327 = vpop.f32.mrb[0].mxu0
        %v1328 = vadd.f32 0.0, %v1327
        %v1329 = vpop.f32.mrb[0].mxu0
        %v1330 = vpop.f32.mrb[0].mxu0
        %v1331 = vpop.f32.mrb[0].mxu0
        %1332 = vdwg.mxu0
        %v1333 = vsel %vm857, %v1328, -inf
        %1334 = vmax.xlane.f32.xlu0 %v1333
        %v1335 = vpop.xlane.xlu0 %1334
        %v1336 = vsub.f32 -inf, %v1335
        %v1337 = vmul.f32 %v1336, 1.442695
        %v1338 = vpow.pop %v1337
        %v1339 = vsub.f32 %v1328, %v1335
        %v1340 = vmul.f32 %v1339, 1.442695
        %v1341 = vpow.pop %v1340
        %v1342 = vmul.f32 %v1338, 0.0
        %v1343 = vsel %vm857, %v1341, 0.0
        %1344 = vadd.xlane.f32.xlu0 %v1343
        %v1345 = vpop.xlane.xlu0 %1344
        %v1346 = vadd.f32 %v1342, %v1345
        %v1347 = vpack.c.bf16 %v1341, %v1341
        %1348 = vrot.lane.b32.xlu0 %v809, 112
        %v1349 = vpop.permute.xlu0 %1348
        %v1352 = vsel %vm857, %v1347, 0
        %1354 = vmatprep.subr.bf16.mxu0 0
        %1355 = vmatpush1.bf16.msra.mxu0 %v1349
        %1356 = vmatprep.subr.bf16.mxu0 0
        %1357 = vmatpush1.bf16.msra.mxu0 0
        %1358 = vmatprep.subr.bf16.mxu0 0
        %1359 = vmatpush1.bf16.msra.mxu0 0
        %1360 = vmatprep.subr.bf16.mxu0 0
        %1361 = vmatpush1.bf16.msra.mxu0 0
        %1362 = vmatprep.subr.bf16.mxu0 0
        %1363 = vmatpush1.bf16.msra.mxu0 0
        %1364 = vmatprep.subr.bf16.mxu0 0
        %1365 = vmatpush1.bf16.msra.mxu0 0
        %1366 = vmatprep.subr.bf16.mxu0 0
        %1367 = vmatpush1.bf16.msra.mxu0 0
        %1368 = vmatprep.subr.bf16.mxu0 0
        %1369 = vmatpush1.bf16.msra.mxu0 0
        %1370 = vmatprep.subr.bf16.mxu0 0
        %1371 = vmatpush1.bf16.msra.mxu0 0
        %1372 = vmatprep.subr.bf16.mxu0 0
        %1373 = vmatpush1.bf16.msra.mxu0 0
        %1374 = vmatprep.subr.bf16.mxu0 0
        %1375 = vmatpush1.bf16.msra.mxu0 0
        %1376 = vmatprep.subr.bf16.mxu0 0
        %1377 = vmatpush1.bf16.msra.mxu0 0
        %1378 = vmatprep.subr.bf16.mxu0 0
        %1379 = vmatpush1.bf16.msra.mxu0 0
        %1380 = vmatprep.subr.bf16.mxu0 0
        %1381 = vmatpush1.bf16.msra.mxu0 0
        %1382 = vmatprep.subr.bf16.mxu0 0
        %1383 = vmatpush1.bf16.msra.mxu0 0
        %1384 = vmatprep.subr.bf16.mxu0 0
        %1385 = vmatpush1.bf16.msra.mxu0 0
        %1386 = vmatprep.mubr.bf16.mxu0 0
        %1387 = vmatmul.mubr.bf16.gmra.mrb[0].mxu0 %v1352
        %v1388 = vpop.f32.mrb[0].mxu0
        %v1389 = vadd.f32 0.0, %v1388
        %v1390 = vpop.f32.mrb[0].mxu0
        %v1391 = vpop.f32.mrb[0].mxu0
        %v1392 = vpop.f32.mrb[0].mxu0
        %1393 = vdwg.mxu0
        %v1394 = vadd.f32 %v1342, %v1389
        %v1395 = vrcp.pop %v1346
        %v1396 = vmul.f32 %v1394, %v1395
        %1398 = vrot.lane.b32.xlu0 %v1396, 16
        %v1399 = vpop.permute.xlu0 %1398
        %vm1401 = vcmask 162944
        %1402 = vst.msk [vmem:[#allocation2] sm:$0xff] %vm1401, %v1399
        %1403 = vrot.lane.b32.xlu0 %v807, 108
        %v1404 = vpop.permute.xlu0 %1403
        %1405 = vrot.lane.b32.xlu0 %v808, 108
        %v1406 = vpop.permute.xlu0 %1405
        %v1408 = vsel %vm810, %v1404, 0
        %v1411 = vsel %vm810, %v1406, 0
        %1413 = vmatprep.subr.bf16.mxu0 0
        %1414 = vmatpush1.bf16.xpose.msra.mxu0 %v1411
        %1415 = vmatprep.subr.bf16.mxu0 0
        %1416 = vmatpush1.bf16.xpose.msra.mxu0 0
        %1417 = vmatprep.subr.bf16.mxu0 0
        %1418 = vmatpush1.bf16.xpose.msra.mxu0 0
        %1419 = vmatprep.subr.bf16.mxu0 0
        %1420 = vmatpush1.bf16.xpose.msra.mxu0 0
        %1421 = vmatprep.subr.bf16.mxu0 0
        %1422 = vmatpush1.bf16.xpose.msra.mxu0 0
        %1423 = vmatprep.subr.bf16.mxu0 0
        %1424 = vmatpush1.bf16.xpose.msra.mxu0 0
        %1425 = vmatprep.subr.bf16.mxu0 0
        %1426 = vmatpush1.bf16.xpose.msra.mxu0 0
        %1427 = vmatprep.subr.bf16.mxu0 0
        %1428 = vmatpush1.bf16.xpose.msra.mxu0 0
        %1429 = vmatprep.subr.bf16.mxu0 0
        %1430 = vmatpush1.bf16.xpose.msra.mxu0 0
        %1431 = vmatprep.subr.bf16.mxu0 0
        %1432 = vmatpush1.bf16.xpose.msra.mxu0 0
        %1433 = vmatprep.subr.bf16.mxu0 0
        %1434 = vmatpush1.bf16.xpose.msra.mxu0 0
        %1435 = vmatprep.subr.bf16.mxu0 0
        %1436 = vmatpush1.bf16.xpose.msra.mxu0 0
        %1437 = vmatprep.subr.bf16.mxu0 0
        %1438 = vmatpush1.bf16.xpose.msra.mxu0 0
        %1439 = vmatprep.subr.bf16.mxu0 0
        %1440 = vmatpush1.bf16.xpose.msra.mxu0 0
        %1441 = vmatprep.subr.bf16.mxu0 0
        %1442 = vmatpush1.bf16.xpose.msra.mxu0 0
        %1443 = vmatprep.subr.bf16.mxu0 0
        %1444 = vmatpush1.bf16.xpose.msra.mxu0 0
        %1445 = vmatprep.mubr.bf16.mxu0 0
        %1446 = vmatmul.mubr.bf16.gmra.mrb[0].mxu0 %v1408
        %v1447 = vpop.f32.mrb[0].mxu0
        %v1448 = vadd.f32 0.0, %v1447
        %v1449 = vpop.f32.mrb[0].mxu0
        %v1450 = vpop.f32.mrb[0].mxu0
        %v1451 = vpop.f32.mrb[0].mxu0
        %1452 = vdwg.mxu0
        %v1453 = vsel %vm857, %v1448, -inf
        %1454 = vmax.xlane.f32.xlu0 %v1453
        %v1455 = vpop.xlane.xlu0 %1454
        %v1456 = vsub.f32 -inf, %v1455
        %v1457 = vmul.f32 %v1456, 1.442695
        %v1458 = vpow.pop %v1457
        %v1459 = vsub.f32 %v1448, %v1455
        %v1460 = vmul.f32 %v1459, 1.442695
        %v1461 = vpow.pop %v1460
        %v1462 = vmul.f32 %v1458, 0.0
        %v1463 = vsel %vm857, %v1461, 0.0
        %1464 = vadd.xlane.f32.xlu0 %v1463
        %v1465 = vpop.xlane.xlu0 %1464
        %v1466 = vadd.f32 %v1462, %v1465
        %v1467 = vpack.c.bf16 %v1461, %v1461
        %1468 = vrot.lane.b32.xlu0 %v809, 108
        %v1469 = vpop.permute.xlu0 %1468
        %v1472 = vsel %vm857, %v1467, 0
        %1474 = vmatprep.subr.bf16.mxu0 0
        %1475 = vmatpush1.bf16.msra.mxu0 %v1469
        %1476 = vmatprep.subr.bf16.mxu0 0
        %1477 = vmatpush1.bf16.msra.mxu0 0
        %1478 = vmatprep.subr.bf16.mxu0 0
        %1479 = vmatpush1.bf16.msra.mxu0 0
        %1480 = vmatprep.subr.bf16.mxu0 0
        %1481 = vmatpush1.bf16.msra.mxu0 0
        %1482 = vmatprep.subr.bf16.mxu0 0
        %1483 = vmatpush1.bf16.msra.mxu0 0
        %1484 = vmatprep.subr.bf16.mxu0 0
        %1485 = vmatpush1.bf16.msra.mxu0 0
        %1486 = vmatprep.subr.bf16.mxu0 0
        %1487 = vmatpush1.bf16.msra.mxu0 0
        %1488 = vmatprep.subr.bf16.mxu0 0
        %1489 = vmatpush1.bf16.msra.mxu0 0
        %1490 = vmatprep.subr.bf16.mxu0 0
        %1491 = vmatpush1.bf16.msra.mxu0 0
        %1492 = vmatprep.subr.bf16.mxu0 0
        %1493 = vmatpush1.bf16.msra.mxu0 0
        %1494 = vmatprep.subr.bf16.mxu0 0
        %1495 = vmatpush1.bf16.msra.mxu0 0
        %1496 = vmatprep.subr.bf16.mxu0 0
        %1497 = vmatpush1.bf16.msra.mxu0 0
        %1498 = vmatprep.subr.bf16.mxu0 0
        %1499 = vmatpush1.bf16.msra.mxu0 0
        %1500 = vmatprep.subr.bf16.mxu0 0
        %1501 = vmatpush1.bf16.msra.mxu0 0
        %1502 = vmatprep.subr.bf16.mxu0 0
        %1503 = vmatpush1.bf16.msra.mxu0 0
        %1504 = vmatprep.subr.bf16.mxu0 0
        %1505 = vmatpush1.bf16.msra.mxu0 0
        %1506 = vmatprep.mubr.bf16.mxu0 0
        %1507 = vmatmul.mubr.bf16.gmra.mrb[0].mxu0 %v1472
        %v1508 = vpop.f32.mrb[0].mxu0
        %v1509 = vadd.f32 0.0, %v1508
        %v1510 = vpop.f32.mrb[0].mxu0
        %v1511 = vpop.f32.mrb[0].mxu0
        %v1512 = vpop.f32.mrb[0].mxu0
        %1513 = vdwg.mxu0
        %v1514 = vadd.f32 %v1462, %v1509
        %v1515 = vrcp.pop %v1466
        %v1516 = vmul.f32 %v1514, %v1515
        %1518 = vrot.lane.b32.xlu0 %v1516, 20
        %v1519 = vpop.permute.xlu0 %1518
        %vm1521 = vcmask 195744
        %1522 = vst.msk [vmem:[#allocation2] sm:$0xff] %vm1521, %v1519
        %1523 = vrot.lane.b32.xlu0 %v807, 104
        %v1524 = vpop.permute.xlu0 %1523
        %1525 = vrot.lane.b32.xlu0 %v808, 104
        %v1526 = vpop.permute.xlu0 %1525
        %v1528 = vsel %vm810, %v1524, 0
        %v1531 = vsel %vm810, %v1526, 0
        %1533 = vmatprep.subr.bf16.mxu0 0
        %1534 = vmatpush1.bf16.xpose.msra.mxu0 %v1531
        %1535 = vmatprep.subr.bf16.mxu0 0
        %1536 = vmatpush1.bf16.xpose.msra.mxu0 0
        %1537 = vmatprep.subr.bf16.mxu0 0
        %1538 = vmatpush1.bf16.xpose.msra.mxu0 0
        %1539 = vmatprep.subr.bf16.mxu0 0
        %1540 = vmatpush1.bf16.xpose.msra.mxu0 0
        %1541 = vmatprep.subr.bf16.mxu0 0
        %1542 = vmatpush1.bf16.xpose.msra.mxu0 0
        %1543 = vmatprep.subr.bf16.mxu0 0
        %1544 = vmatpush1.bf16.xpose.msra.mxu0 0
        %1545 = vmatprep.subr.bf16.mxu0 0
        %1546 = vmatpush1.bf16.xpose.msra.mxu0 0
        %1547 = vmatprep.subr.bf16.mxu0 0
        %1548 = vmatpush1.bf16.xpose.msra.mxu0 0
        %1549 = vmatprep.subr.bf16.mxu0 0
        %1550 = vmatpush1.bf16.xpose.msra.mxu0 0
        %1551 = vmatprep.subr.bf16.mxu0 0
        %1552 = vmatpush1.bf16.xpose.msra.mxu0 0
        %1553 = vmatprep.subr.bf16.mxu0 0
        %1554 = vmatpush1.bf16.xpose.msra.mxu0 0
        %1555 = vmatprep.subr.bf16.mxu0 0
        %1556 = vmatpush1.bf16.xpose.msra.mxu0 0
        %1557 = vmatprep.subr.bf16.mxu0 0
        %1558 = vmatpush1.bf16.xpose.msra.mxu0 0
        %1559 = vmatprep.subr.bf16.mxu0 0
        %1560 = vmatpush1.bf16.xpose.msra.mxu0 0
        %1561 = vmatprep.subr.bf16.mxu0 0
        %1562 = vmatpush1.bf16.xpose.msra.mxu0 0
        %1563 = vmatprep.subr.bf16.mxu0 0
        %1564 = vmatpush1.bf16.xpose.msra.mxu0 0
        %1565 = vmatprep.mubr.bf16.mxu0 0
        %1566 = vmatmul.mubr.bf16.gmra.mrb[0].mxu0 %v1528
        %v1567 = vpop.f32.mrb[0].mxu0
        %v1568 = vadd.f32 0.0, %v1567
        %v1569 = vpop.f32.mrb[0].mxu0
        %v1570 = vpop.f32.mrb[0].mxu0
        %v1571 = vpop.f32.mrb[0].mxu0
        %1572 = vdwg.mxu0
        %v1573 = vsel %vm857, %v1568, -inf
        %1574 = vmax.xlane.f32.xlu0 %v1573
        %v1575 = vpop.xlane.xlu0 %1574
        %v1576 = vsub.f32 -inf, %v1575
        %v1577 = vmul.f32 %v1576, 1.442695
        %v1578 = vpow.pop %v1577
        %v1579 = vsub.f32 %v1568, %v1575
        %v1580 = vmul.f32 %v1579, 1.442695
        %v1581 = vpow.pop %v1580
        %v1582 = vmul.f32 %v1578, 0.0
        %v1583 = vsel %vm857, %v1581, 0.0
        %1584 = vadd.xlane.f32.xlu0 %v1583
        %v1585 = vpop.xlane.xlu0 %1584
        %v1586 = vadd.f32 %v1582, %v1585
        %v1587 = vpack.c.bf16 %v1581, %v1581
        %1588 = vrot.lane.b32.xlu0 %v809, 104
        %v1589 = vpop.permute.xlu0 %1588
        %v1592 = vsel %vm857, %v1587, 0
        %1594 = vmatprep.subr.bf16.mxu0 0
        %1595 = vmatpush1.bf16.msra.mxu0 %v1589
        %1596 = vmatprep.subr.bf16.mxu0 0
        %1597 = vmatpush1.bf16.msra.mxu0 0
        %1598 = vmatprep.subr.bf16.mxu0 0
        %1599 = vmatpush1.bf16.msra.mxu0 0
        %1600 = vmatprep.subr.bf16.mxu0 0
        %1601 = vmatpush1.bf16.msra.mxu0 0
        %1602 = vmatprep.subr.bf16.mxu0 0
        %1603 = vmatpush1.bf16.msra.mxu0 0
        %1604 = vmatprep.subr.bf16.mxu0 0
        %1605 = vmatpush1.bf16.msra.mxu0 0
        %1606 = vmatprep.subr.bf16.mxu0 0
        %1607 = vmatpush1.bf16.msra.mxu0 0
        %1608 = vmatprep.subr.bf16.mxu0 0
        %1609 = vmatpush1.bf16.msra.mxu0 0
        %1610 = vmatprep.subr.bf16.mxu0 0
        %1611 = vmatpush1.bf16.msra.mxu0 0
        %1612 = vmatprep.subr.bf16.mxu0 0
        %1613 = vmatpush1.bf16.msra.mxu0 0
        %1614 = vmatprep.subr.bf16.mxu0 0
        %1615 = vmatpush1.bf16.msra.mxu0 0
        %1616 = vmatprep.subr.bf16.mxu0 0
        %1617 = vmatpush1.bf16.msra.mxu0 0
        %1618 = vmatprep.subr.bf16.mxu0 0
        %1619 = vmatpush1.bf16.msra.mxu0 0
        %1620 = vmatprep.subr.bf16.mxu0 0
        %1621 = vmatpush1.bf16.msra.mxu0 0
        %1622 = vmatprep.subr.bf16.mxu0 0
        %1623 = vmatpush1.bf16.msra.mxu0 0
        %1624 = vmatprep.subr.bf16.mxu0 0
        %1625 = vmatpush1.bf16.msra.mxu0 0
        %1626 = vmatprep.mubr.bf16.mxu0 0
        %1627 = vmatmul.mubr.bf16.gmra.mrb[0].mxu0 %v1592
        %v1628 = vpop.f32.mrb[0].mxu0
        %v1629 = vadd.f32 0.0, %v1628
        %v1630 = vpop.f32.mrb[0].mxu0
        %v1631 = vpop.f32.mrb[0].mxu0
        %v1632 = vpop.f32.mrb[0].mxu0
        %1633 = vdwg.mxu0
        %v1634 = vadd.f32 %v1582, %v1629
        %v1635 = vrcp.pop %v1586
        %v1636 = vmul.f32 %v1634, %v1635
        %1638 = vrot.lane.b32.xlu0 %v1636, 24
        %v1639 = vpop.permute.xlu0 %1638
        %vm1641 = vcmask 228544
        %1642 = vst.msk [vmem:[#allocation2] sm:$0xff] %vm1641, %v1639
        %1643 = vrot.lane.b32.xlu0 %v807, 100
        %v1644 = vpop.permute.xlu0 %1643
        %1645 = vrot.lane.b32.xlu0 %v808, 100
        %v1646 = vpop.permute.xlu0 %1645
        %v1648 = vsel %vm810, %v1644, 0
        %v1651 = vsel %vm810, %v1646, 0
        %1653 = vmatprep.subr.bf16.mxu0 0
        %1654 = vmatpush1.bf16.xpose.msra.mxu0 %v1651
        %1655 = vmatprep.subr.bf16.mxu0 0
        %1656 = vmatpush1.bf16.xpose.msra.mxu0 0
        %1657 = vmatprep.subr.bf16.mxu0 0
        %1658 = vmatpush1.bf16.xpose.msra.mxu0 0
        %1659 = vmatprep.subr.bf16.mxu0 0
        %1660 = vmatpush1.bf16.xpose.msra.mxu0 0
        %1661 = vmatprep.subr.bf16.mxu0 0
        %1662 = vmatpush1.bf16.xpose.msra.mxu0 0
        %1663 = vmatprep.subr.bf16.mxu0 0
        %1664 = vmatpush1.bf16.xpose.msra.mxu0 0
        %1665 = vmatprep.subr.bf16.mxu0 0
        %1666 = vmatpush1.bf16.xpose.msra.mxu0 0
        %1667 = vmatprep.subr.bf16.mxu0 0
        %1668 = vmatpush1.bf16.xpose.msra.mxu0 0
        %1669 = vmatprep.subr.bf16.mxu0 0
        %1670 = vmatpush1.bf16.xpose.msra.mxu0 0
        %1671 = vmatprep.subr.bf16.mxu0 0
        %1672 = vmatpush1.bf16.xpose.msra.mxu0 0
        %1673 = vmatprep.subr.bf16.mxu0 0
        %1674 = vmatpush1.bf16.xpose.msra.mxu0 0
        %1675 = vmatprep.subr.bf16.mxu0 0
        %1676 = vmatpush1.bf16.xpose.msra.mxu0 0
        %1677 = vmatprep.subr.bf16.mxu0 0
        %1678 = vmatpush1.bf16.xpose.msra.mxu0 0
        %1679 = vmatprep.subr.bf16.mxu0 0
        %1680 = vmatpush1.bf16.xpose.msra.mxu0 0
        %1681 = vmatprep.subr.bf16.mxu0 0
        %1682 = vmatpush1.bf16.xpose.msra.mxu0 0
        %1683 = vmatprep.subr.bf16.mxu0 0
        %1684 = vmatpush1.bf16.xpose.msra.mxu0 0
        %1685 = vmatprep.mubr.bf16.mxu0 0
        %1686 = vmatmul.mubr.bf16.gmra.mrb[0].mxu0 %v1648
        %v1687 = vpop.f32.mrb[0].mxu0
        %v1688 = vadd.f32 0.0, %v1687
        %v1689 = vpop.f32.mrb[0].mxu0
        %v1690 = vpop.f32.mrb[0].mxu0
        %v1691 = vpop.f32.mrb[0].mxu0
        %1692 = vdwg.mxu0
        %v1693 = vsel %vm857, %v1688, -inf
        %1694 = vmax.xlane.f32.xlu0 %v1693
        %v1695 = vpop.xlane.xlu0 %1694
        %v1696 = vsub.f32 -inf, %v1695
        %v1697 = vmul.f32 %v1696, 1.442695
        %v1698 = vpow.pop %v1697
        %v1699 = vsub.f32 %v1688, %v1695
        %v1700 = vmul.f32 %v1699, 1.442695
        %v1701 = vpow.pop %v1700
        %v1702 = vmul.f32 %v1698, 0.0
        %v1703 = vsel %vm857, %v1701, 0.0
        %1704 = vadd.xlane.f32.xlu0 %v1703
        %v1705 = vpop.xlane.xlu0 %1704
        %v1706 = vadd.f32 %v1702, %v1705
        %v1707 = vpack.c.bf16 %v1701, %v1701
        %1708 = vrot.lane.b32.xlu0 %v809, 100
        %v1709 = vpop.permute.xlu0 %1708
        %v1712 = vsel %vm857, %v1707, 0
        %1714 = vmatprep.subr.bf16.mxu0 0
        %1715 = vmatpush1.bf16.msra.mxu0 %v1709
        %1716 = vmatprep.subr.bf16.mxu0 0
        %1717 = vmatpush1.bf16.msra.mxu0 0
        %1718 = vmatprep.subr.bf16.mxu0 0
        %1719 = vmatpush1.bf16.msra.mxu0 0
        %1720 = vmatprep.subr.bf16.mxu0 0
        %1721 = vmatpush1.bf16.msra.mxu0 0
        %1722 = vmatprep.subr.bf16.mxu0 0
        %1723 = vmatpush1.bf16.msra.mxu0 0
        %1724 = vmatprep.subr.bf16.mxu0 0
        %1725 = vmatpush1.bf16.msra.mxu0 0
        %1726 = vmatprep.subr.bf16.mxu0 0
        %1727 = vmatpush1.bf16.msra.mxu0 0
        %1728 = vmatprep.subr.bf16.mxu0 0
        %1729 = vmatpush1.bf16.msra.mxu0 0
        %1730 = vmatprep.subr.bf16.mxu0 0
        %1731 = vmatpush1.bf16.msra.mxu0 0
        %1732 = vmatprep.subr.bf16.mxu0 0
        %1733 = vmatpush1.bf16.msra.mxu0 0
        %1734 = vmatprep.subr.bf16.mxu0 0
        %1735 = vmatpush1.bf16.msra.mxu0 0
        %1736 = vmatprep.subr.bf16.mxu0 0
        %1737 = vmatpush1.bf16.msra.mxu0 0
        %1738 = vmatprep.subr.bf16.mxu0 0
        %1739 = vmatpush1.bf16.msra.mxu0 0
        %1740 = vmatprep.subr.bf16.mxu0 0
        %1741 = vmatpush1.bf16.msra.mxu0 0
        %1742 = vmatprep.subr.bf16.mxu0 0
        %1743 = vmatpush1.bf16.msra.mxu0 0
        %1744 = vmatprep.subr.bf16.mxu0 0
        %1745 = vmatpush1.bf16.msra.mxu0 0
        %1746 = vmatprep.mubr.bf16.mxu0 0
        %1747 = vmatmul.mubr.bf16.gmra.mrb[0].mxu0 %v1712
        %v1748 = vpop.f32.mrb[0].mxu0
        %v1749 = vadd.f32 0.0, %v1748
        %v1750 = vpop.f32.mrb[0].mxu0
        %v1751 = vpop.f32.mrb[0].mxu0
        %v1752 = vpop.f32.mrb[0].mxu0
        %1753 = vdwg.mxu0
        %v1754 = vadd.f32 %v1702, %v1749
        %v1755 = vrcp.pop %v1706
        %v1756 = vmul.f32 %v1754, %v1755
        %1758 = vrot.lane.b32.xlu0 %v1756, 28
        %v1759 = vpop.permute.xlu0 %1758
        %vm1761 = vcmask 261344
        %1762 = vst.msk [vmem:[#allocation2] sm:$0xff] %vm1761, %v1759
        %v1763 = vld [vmem:[#allocation2] sm:$0xff]
        %v1764 = vpack.c.bf16 %v1763, %v1763
        %v1765 = vld [vmem:[%s5] sm:$0xf]
        %v1766 = vld [vmem:[%s5 + $0x4] sm:$0xf]
        %v1767 = vld [vmem:[%s5 + $0x8] sm:$0xf]
        %v1768 = vld [vmem:[%s5 + $0xc] sm:$0xf]
        %v1773 = vunpack.c.l.b16 %v1765
        %v1774 = vunpack.c.l.b16 %v1766
        %v1775 = vunpack.c.l.b16 %v1767
        %v1776 = vunpack.c.l.b16 %v1768
        %v1777 = vpack.c.b16 %v1774, %v1773
        %v1778 = vpack.c.b16 %v1776, %v1775
        %vm1781 = vcmask 261120
        %v1783 = vsel %vm1781, %v1764, 0
        %1785 = vmatprep.subr.bf16.mxu0 0
        %1786 = vmatpush1.bf16.msra.mxu0 %v1777
        %1787 = vmatprep.subr.bf16.mxu0 0
        %1788 = vmatpush1.bf16.msra.mxu0 %v1778
        %1789 = vmatprep.subr.bf16.mxu0 0
        %1790 = vmatpush1.bf16.msra.mxu0 0
        %1791 = vmatprep.subr.bf16.mxu0 0
        %1792 = vmatpush1.bf16.msra.mxu0 0
        %1793 = vmatprep.subr.bf16.mxu0 0
        %1794 = vmatpush1.bf16.msra.mxu0 0
        %1795 = vmatprep.subr.bf16.mxu0 0
        %1796 = vmatpush1.bf16.msra.mxu0 0
        %1797 = vmatprep.subr.bf16.mxu0 0
        %1798 = vmatpush1.bf16.msra.mxu0 0
        %1799 = vmatprep.subr.bf16.mxu0 0
        %1800 = vmatpush1.bf16.msra.mxu0 0
        %1801 = vmatprep.subr.bf16.mxu0 0
        %1802 = vmatpush1.bf16.msra.mxu0 0
        %1803 = vmatprep.subr.bf16.mxu0 0
        %1804 = vmatpush1.bf16.msra.mxu0 0
        %1805 = vmatprep.subr.bf16.mxu0 0
        %1806 = vmatpush1.bf16.msra.mxu0 0
        %1807 = vmatprep.subr.bf16.mxu0 0
        %1808 = vmatpush1.bf16.msra.mxu0 0
        %1809 = vmatprep.subr.bf16.mxu0 0
        %1810 = vmatpush1.bf16.msra.mxu0 0
        %1811 = vmatprep.subr.bf16.mxu0 0
        %1812 = vmatpush1.bf16.msra.mxu0 0
        %1813 = vmatprep.subr.bf16.mxu0 0
        %1814 = vmatpush1.bf16.msra.mxu0 0
        %1815 = vmatprep.subr.bf16.mxu0 0
        %1816 = vmatpush1.bf16.msra.mxu0 0
        %1817 = vmatprep.mubr.bf16.mxu0 0
        %1818 = vmatmul.mubr.bf16.gmra.mrb[0].mxu0 %v1783
        %v1819 = vpop.f32.mrb[0].mxu0
        %v1820 = vadd.f32 0.0, %v1819
        %v1821 = vpop.f32.mrb[0].mxu0
        %v1822 = vpop.f32.mrb[0].mxu0
        %v1823 = vpop.f32.mrb[0].mxu0
        %1824 = vdwg.mxu0
        %v1825 = vadd.f32 %v487, %v1820
        %1826 = vadd.xlane.f32.xlu0 %v1825
        %v1827 = vpop.xlane.xlu0 %1826
        %v1828 = vmul.f32 %v1827, 0.03125
        %v1829 = vmul.f32 %v1825, %v1825
        %1830 = vadd.xlane.f32.xlu0 %v1829
        %v1831 = vpop.xlane.xlu0 %1830
        %v1832 = vmul.f32 %v1831, 0.03125
        %v1833 = vmul.f32 %v1828, %v1828
        %v1834 = vsub.f32 %v1832, %v1833
        %v1835 = vmax.f32 %v1834, 0.0
        %v1836 = vsub.f32 %v1825, %v1828
        %v1837 = vadd.f32 %v1835, 1e-05
        %v1838 = vrsqrt.pop %v1837
        %v1839 = vmul.f32 %v1836, %v1838
        %v1840 = vlaneseq
        %v1841 = vshrl.u32 %v1840, 7
        %v1842 = vsub.s32 0, %v1841
        %v1843 = vrot.slane %v496, %v1842
        %v1844 = vmul.f32 %v1839, %v1843
        %v1845 = vlaneseq
        %v1846 = vshrl.u32 %v1845, 7
        %v1847 = vsub.s32 0, %v1846
        %v1848 = vrot.slane %v497, %v1847
        %v1849 = vadd.f32 %v1844, %v1848
        %v1850 = vpack.c.bf16 %v1849, %v1849
        %v1851 = vld [vmem:[#allocation12] sm:$0xf]
        %v1852 = vld [vmem:[#allocation12 + $0x4] sm:$0xf]
        %v1853 = vld [vmem:[#allocation12 + $0x8] sm:$0xf]
        %v1854 = vld [vmem:[#allocation12 + $0xc] sm:$0xf]
        %v1855 = vld [vmem:[#allocation12 + $0x10] sm:$0xf]
        %v1856 = vld [vmem:[#allocation12 + $0x14] sm:$0xf]
        %v1857 = vld [vmem:[#allocation12 + $0x18] sm:$0xf]
        %v1858 = vld [vmem:[#allocation12 + $0x1c] sm:$0xf]
        %v1859 = vld [vmem:[#allocation12 + $0x20] sm:$0xf]
        %v1860 = vld [vmem:[#allocation12 + $0x24] sm:$0xf]
        %v1861 = vld [vmem:[#allocation12 + $0x28] sm:$0xf]
        %v1862 = vld [vmem:[#allocation12 + $0x2c] sm:$0xf]
        %v1863 = vld [vmem:[#allocation12 + $0x30] sm:$0xf]
        %v1864 = vld [vmem:[#allocation12 + $0x34] sm:$0xf]
        %v1865 = vld [vmem:[#allocation12 + $0x38] sm:$0xf]
        %v1866 = vld [vmem:[#allocation12 + $0x3c] sm:$0xf]
        %v1867 = vld [vmem:[%s7] sm:$0x1]
        %v1869 = vlaneseq
        %v1870 = vshrl.u32 %v1869, 7
        %v1871 = vsub.s32 0, %v1870
        %v1872 = vrot.slane %v1867, %v1871
        %v1890 = vunpack.c.l.b16 %v1851
        %v1891 = vunpack.c.l.b16 %v1852
        %v1892 = vunpack.c.l.b16 %v1853
        %v1893 = vunpack.c.l.b16 %v1854
        %v1894 = vunpack.c.l.b16 %v1855
        %v1895 = vunpack.c.l.b16 %v1856
        %v1896 = vunpack.c.l.b16 %v1857
        %v1897 = vunpack.c.l.b16 %v1858
        %v1898 = vunpack.c.l.b16 %v1859
        %v1899 = vunpack.c.l.b16 %v1860
        %v1900 = vunpack.c.l.b16 %v1861
        %v1901 = vunpack.c.l.b16 %v1862
        %v1902 = vunpack.c.l.b16 %v1863
        %v1903 = vunpack.c.l.b16 %v1864
        %v1904 = vunpack.c.l.b16 %v1865
        %v1905 = vunpack.c.l.b16 %v1866
        %v1906 = vpack.c.b16 %v1891, %v1890
        %v1907 = vpack.c.b16 %v1893, %v1892
        %v1908 = vpack.c.b16 %v1895, %v1894
        %v1909 = vpack.c.b16 %v1897, %v1896
        %v1910 = vpack.c.b16 %v1899, %v1898
        %v1911 = vpack.c.b16 %v1901, %v1900
        %v1912 = vpack.c.b16 %v1903, %v1902
        %v1913 = vpack.c.b16 %v1905, %v1904
        %1922 = vmatprep.subr.bf16.mxu0 0
        %1923 = vmatpush1.bf16.msra.mxu0 %v1906
        %1924 = vmatprep.subr.bf16.mxu0 0
        %1925 = vmatpush1.bf16.msra.mxu0 %v1907
        %1926 = vmatprep.subr.bf16.mxu0 0
        %1927 = vmatpush1.bf16.msra.mxu0 %v1908
        %1928 = vmatprep.subr.bf16.mxu0 0
        %1929 = vmatpush1.bf16.msra.mxu0 %v1909
        %1930 = vmatprep.subr.bf16.mxu0 0
        %1931 = vmatpush1.bf16.msra.mxu0 %v1910
        %1932 = vmatprep.subr.bf16.mxu0 0
        %1933 = vmatpush1.bf16.msra.mxu0 %v1911
        %1934 = vmatprep.subr.bf16.mxu0 0
        %1935 = vmatpush1.bf16.msra.mxu0 %v1912
        %1936 = vmatprep.subr.bf16.mxu0 0
        %1937 = vmatpush1.bf16.msra.mxu0 %v1913
        %1938 = vmatprep.subr.bf16.mxu0 0
        %1939 = vmatpush1.bf16.msra.mxu0 0
        %1940 = vmatprep.subr.bf16.mxu0 0
        %1941 = vmatpush1.bf16.msra.mxu0 0
        %1942 = vmatprep.subr.bf16.mxu0 0
        %1943 = vmatpush1.bf16.msra.mxu0 0
        %1944 = vmatprep.subr.bf16.mxu0 0
        %1945 = vmatpush1.bf16.msra.mxu0 0
        %1946 = vmatprep.subr.bf16.mxu0 0
        %1947 = vmatpush1.bf16.msra.mxu0 0
        %1948 = vmatprep.subr.bf16.mxu0 0
        %1949 = vmatpush1.bf16.msra.mxu0 0
        %1950 = vmatprep.subr.bf16.mxu0 0
        %1951 = vmatpush1.bf16.msra.mxu0 0
        %1952 = vmatprep.subr.bf16.mxu0 0
        %1953 = vmatpush1.bf16.msra.mxu0 0
        %1954 = vmatprep.mubr.bf16.mxu0 0
        %1955 = vmatmul.mubr.bf16.gmra.mrb[0].mxu0 %v1850
        %v1956 = vpop.f32.mrb[0].mxu0
        %v1957 = vadd.f32 %v1872, %v1956
        %v1958 = vpop.f32.mrb[0].mxu0
        %v1959 = vpop.f32.mrb[0].mxu0
        %v1960 = vpop.f32.mrb[0].mxu0
        %1961 = vdwg.mxu0
        %v1962 = vmul.f32 %v1957, 0.5
        %v1963 = vmul.f32 %v1957, 0.70710677
        %vm1964 = vcmp.ge.f32.partialorder %v1963, 0.0
        %v1965 = vsel %vm1964, 1.0, -1.0
        %v1966 = vand.u32 2147483647, %v1963
        %v1967 = vmul.f32 %v1966, 0.3275911
        %v1968 = vadd.f32 %v1967, 1.0
        %v1969 = vrcp.pop %v1968
        %v1970 = vmul.f32 %v1969, 1.0614054
        %v1971 = vadd.f32 %v1970, -1.4531521
        %v1972 = vmul.f32 %v1969, %v1971
        %v1973 = vadd.f32 %v1972, 1.4214138
        %v1974 = vmul.f32 %v1969, %v1973
        %v1975 = vadd.f32 %v1974, -0.28449672
        %v1976 = vmul.f32 %v1969, %v1975
        %v1977 = vadd.f32 %v1976, 0.2548296
        %v1978 = vmul.f32 %v1969, %v1977
        %v1979 = vsub.f32 0.0, %v1966
        %v1980 = vmul.f32 %v1979, %v1966
        %v1981 = vmul.f32 %v1980, 1.442695
        %v1982 = vpow.pop %v1981
        %v1983 = vmul.f32 %v1978, %v1982
        %v1984 = vsub.f32 1.0, %v1983
        %v1985 = vmul.f32 %v1965, %v1984
        %v1986 = vadd.f32 %v1985, 1.0
        %v1987 = vmul.f32 %v1962, %v1986
        %v1988 = vpack.c.bf16 %v1987, %v1987
        %v1989 = vld [vmem:[#allocation14] sm:$0xf]
        %v1990 = vld [vmem:[#allocation14 + $0x4] sm:$0xf]
        %v1991 = vld [vmem:[#allocation14 + $0x8] sm:$0xf]
        %v1992 = vld [vmem:[#allocation14 + $0xc] sm:$0xf]
        %v1993 = vld [vmem:[#allocation14 + $0x10] sm:$0xf]
        %v1994 = vld [vmem:[#allocation14 + $0x14] sm:$0xf]
        %v1995 = vld [vmem:[#allocation14 + $0x18] sm:$0xf]
        %v1996 = vld [vmem:[#allocation14 + $0x1c] sm:$0xf]
        %v1997 = vld [vmem:[#allocation14 + $0x20] sm:$0xf]
        %v1998 = vld [vmem:[#allocation14 + $0x24] sm:$0xf]
        %v1999 = vld [vmem:[#allocation14 + $0x28] sm:$0xf]
        %v2000 = vld [vmem:[#allocation14 + $0x2c] sm:$0xf]
        %v2001 = vld [vmem:[#allocation14 + $0x30] sm:$0xf]
        %v2002 = vld [vmem:[#allocation14 + $0x34] sm:$0xf]
        %v2003 = vld [vmem:[#allocation14 + $0x38] sm:$0xf]
        %v2004 = vld [vmem:[#allocation14 + $0x3c] sm:$0xf]
        %v2005 = vld [vmem:[%s9] sm:$0x1]
        %v2007 = vlaneseq
        %v2008 = vshrl.u32 %v2007, 7
        %v2009 = vsub.s32 0, %v2008
        %v2010 = vrot.slane %v2005, %v2009
        %v2028 = vunpack.c.l.b16 %v1989
        %v2029 = vunpack.c.l.b16 %v1990
        %v2030 = vunpack.c.l.b16 %v1991
        %v2031 = vunpack.c.l.b16 %v1992
        %v2032 = vunpack.c.l.b16 %v1993
        %v2033 = vunpack.c.l.b16 %v1994
        %v2034 = vunpack.c.l.b16 %v1995
        %v2035 = vunpack.c.l.b16 %v1996
        %v2036 = vunpack.c.l.b16 %v1997
        %v2037 = vunpack.c.l.b16 %v1998
        %v2038 = vunpack.c.l.b16 %v1999
        %v2039 = vunpack.c.l.b16 %v2000
        %v2040 = vunpack.c.l.b16 %v2001
        %v2041 = vunpack.c.l.b16 %v2002
        %v2042 = vunpack.c.l.b16 %v2003
        %v2043 = vunpack.c.l.b16 %v2004
        %v2044 = vpack.c.b16 %v2029, %v2028
        %v2045 = vpack.c.b16 %v2031, %v2030
        %v2046 = vpack.c.b16 %v2033, %v2032
        %v2047 = vpack.c.b16 %v2035, %v2034
        %v2048 = vpack.c.b16 %v2037, %v2036
        %v2049 = vpack.c.b16 %v2039, %v2038
        %v2050 = vpack.c.b16 %v2041, %v2040
        %v2051 = vpack.c.b16 %v2043, %v2042
        %2060 = vmatprep.subr.bf16.mxu0 0
        %2061 = vmatpush1.bf16.msra.mxu0 %v2044
        %2062 = vmatprep.subr.bf16.mxu0 0
        %2063 = vmatpush1.bf16.msra.mxu0 %v2045
        %2064 = vmatprep.subr.bf16.mxu0 0
        %2065 = vmatpush1.bf16.msra.mxu0 %v2046
        %2066 = vmatprep.subr.bf16.mxu0 0
        %2067 = vmatpush1.bf16.msra.mxu0 %v2047
        %2068 = vmatprep.subr.bf16.mxu0 0
        %2069 = vmatpush1.bf16.msra.mxu0 %v2048
        %2070 = vmatprep.subr.bf16.mxu0 0
        %2071 = vmatpush1.bf16.msra.mxu0 %v2049
        %2072 = vmatprep.subr.bf16.mxu0 0
        %2073 = vmatpush1.bf16.msra.mxu0 %v2050
        %2074 = vmatprep.subr.bf16.mxu0 0
        %2075 = vmatpush1.bf16.msra.mxu0 %v2051
        %2076 = vmatprep.subr.bf16.mxu0 0
        %2077 = vmatpush1.bf16.msra.mxu0 0
        %2078 = vmatprep.subr.bf16.mxu0 0
        %2079 = vmatpush1.bf16.msra.mxu0 0
        %2080 = vmatprep.subr.bf16.mxu0 0
        %2081 = vmatpush1.bf16.msra.mxu0 0
        %2082 = vmatprep.subr.bf16.mxu0 0
        %2083 = vmatpush1.bf16.msra.mxu0 0
        %2084 = vmatprep.subr.bf16.mxu0 0
        %2085 = vmatpush1.bf16.msra.mxu0 0
        %2086 = vmatprep.subr.bf16.mxu0 0
        %2087 = vmatpush1.bf16.msra.mxu0 0
        %2088 = vmatprep.subr.bf16.mxu0 0
        %2089 = vmatpush1.bf16.msra.mxu0 0
        %2090 = vmatprep.subr.bf16.mxu0 0
        %2091 = vmatpush1.bf16.msra.mxu0 0
        %2092 = vmatprep.mubr.bf16.mxu0 0
        %2093 = vmatmul.mubr.bf16.gmra.mrb[0].mxu0 %v1988
        %v2094 = vpop.f32.mrb[0].mxu0
        %v2095 = vadd.f32 %v2010, %v2094
        %v2096 = vpop.f32.mrb[0].mxu0
        %v2097 = vpop.f32.mrb[0].mxu0
        %v2098 = vpop.f32.mrb[0].mxu0
        %2099 = vdwg.mxu0
        %v2100 = vadd.f32 %v1825, %v2095
        %2101 = vst [vmem:[%s484] sm:$0xff] %v2100
        %s2102 = sand.u32 %s260, 1
        %s2103 = scalar_lea.sflag [#allocation5], %s2102
        %s2104 = sand.u32 %s260, 1
        %s2105 = smul.addr %s2104, 8
        %s2106 = scalar_lea.vmem [#allocation15], %s2105
        // Predicated region
        $region89: #{tpu_custom_call.1} parent=59 // pred_check
          %p2107 = pneg %p270
        $region90: #{tpu_custom_call.1} parent=59 // pred_check_branch
          %2109 = sbr.rel (%p2107) target = $region92
        $region91: #{tpu_custom_call.1} parent=59 // pred_region
          %s2111 = ssub.s32 128, 128
          %2112 = vsyncadd %s2103, %s2111
          %s2113 = smul.addr %s32, 128
          %s2114 = scalar_lea.hbm %s10, %s2113
          %s2116 = sshll.u32 %s2106, 4
          %s2117 = int_to_ptr.vmem [resolvable:$true] %s2116
          %2119 = dma.vmem_to_hbm [thread:$0]  %s2117, 128, %s2114, %s2103
        $region92: #{tpu_custom_call.1} parent=59 // pred_fallthru
          _
      $region60: #{tpu_custom_call.1} parent=5 // pred_fallthru
        _
      %p2120 = scmp.le.s32.totalorder 2, %s27
      // Predicated region
      $region93: #{tpu_custom_call.1} parent=5 // pred_check
        %p2121 = pneg %p2120
      $region94: #{tpu_custom_call.1} parent=5 // pred_check_branch
        %2123 = sbr.rel (%p2121) target = $region96
      $region95: #{tpu_custom_call.1} parent=5 // pred_region
        %s2124 = ssub.s32 %s27, 2
        // Predicated region
        $region97: #{tpu_custom_call.1} parent=95 // pred_check
          %p2125 = pneg %p276
        $region98: #{tpu_custom_call.1} parent=95 // pred_check_branch
          %2127 = sbr.rel (%p2125) target = $region100
        $region99: #{tpu_custom_call.1} parent=95 // pred_region
          %s2128 = sand.u32 %s261, 1
          %s2129 = scalar_lea.sflag [#allocation5], %s2128
          %s2130 = sand.u32 %s261, 1
          %s2131 = smul.addr %s2130, 8
          %s2132 = scalar_lea.vmem [#allocation15], %s2131
          %2133 = dma.done %s2129, 128
        $region100: #{tpu_custom_call.1} parent=95 // pred_fallthru
          _
      $region96: #{tpu_custom_call.1} parent=5 // pred_fallthru
        _
    $region6: #{tpu_custom_call.1} parent=1 // loop_footer
      %s31 = sadd.s32 1, %s27
    $region7: #{tpu_custom_call.1} parent=1 // loop_footer_branch
      %26 = sbr.rel target = $region3
    $region8: #{tpu_custom_call.1} parent=1 // loop_exit
      _
    %2134 = vsyncpa [#allocation4], 1
    %s2135 = scalar_lea.sflag [#allocation4], 1
    %2136 = vsyncpa %s2135, 1
    %2137 = vsyncpa [#allocation7], 1
    %s2138 = scalar_lea.sflag [#allocation7], 1
    %2139 = vsyncpa %s2138, 1
    %2140 = vsyncpa [#allocation10], 1
    %2141 = vsyncpa [#allocation13], 1
    %2142 = vsyncpa [#allocation5], 1
    %s2143 = scalar_lea.sflag [#allocation5], 1
    %2144 = vsyncpa %s2143, 1

</llo_original>
